<compile_context>
chip_gen: v7x
topology: tpu7x:2x2x1
jax: 0.10.0
libtpu: 0.0.40
codegen_flags: <defaults>
</compile_context>

<pallas_src>
import functools

import jax
import jax.numpy as jnp
from jax import lax
from jax.experimental import pallas as pl
from jax.experimental.pallas import tpu as pltpu

BN_EPS = 1e-5
LANE = 128


def _round_up(v, m):
    return ((v + m - 1) // m) * m


def _vmem_limit_bytes():
    """~75% of physical VMEM, capped at 100 MiB (~48 MiB v7x, ~96 MiB v5e/v6e)."""
    try:
        cap = pltpu.get_tpu_info().vmem_capacity_bytes
    except Exception:
        cap = 64 * 1024 * 1024          # conservative (v7x-sized) fallback
    return min(int(cap * 3 // 4), 100 * 1024 * 1024)


def _bn_scale_shift(col_sum, col_sumsq, n, gamma, beta):
    """Fold training-mode BatchNorm into hn = h*s + t.  Variance clamped >= 0
    to guard the one-pass form against catastrophic cancellation."""
    inv_n = 1.0 / n
    mu = col_sum * inv_n
    var = jnp.maximum(col_sumsq * inv_n - mu * mu, 0.0)
    s = gamma * lax.rsqrt(var + BN_EPS)
    t = beta - mu * s
    return s, t


# ---------------------------------------------------------------------------
# Fused whole-batch-resident kernel (small / medium N)
# ---------------------------------------------------------------------------
def _fused_mlp_kernel(x_ref, w1_ref, g1_ref, be1_ref,
                      w2_ref, g2_ref, be2_ref,
                      w3_ref, b3_ref, o_ref):
    n = x_ref.shape[0]
    ones = jnp.ones((1, n), jnp.float32)

    def bn_relu(h, gamma, beta):
        # batch-axis reductions on the MXU (sum + sum-of-squares)
        col_sum = jnp.dot(ones, h, preferred_element_type=jnp.float32)
        col_ssq = jnp.dot(ones, h * h, preferred_element_type=jnp.float32)
        s, t = _bn_scale_shift(col_sum, col_ssq, n, gamma, beta)
        return jnp.maximum(h * s + t, 0.0)

    # layer 1 (bias absorbed by training-mode BN)
    h = jnp.dot(x_ref[...].astype(w1_ref.dtype), w1_ref[...],
                preferred_element_type=jnp.float32)
    h = bn_relu(h, g1_ref[...], be1_ref[...])
    # layer 2 (bias absorbed by BN)
    h = jnp.dot(h.astype(w2_ref.dtype), w2_ref[...],
                preferred_element_type=jnp.float32)
    h = bn_relu(h, g2_ref[...], be2_ref[...])
    # layer 3 + tanh (lane-dense padded, bf16 writeback)
    h = jnp.dot(h.astype(w3_ref.dtype), w3_ref[...],
                preferred_element_type=jnp.float32) + b3_ref[...]
    o_ref[...] = jnp.tanh(h).astype(o_ref.dtype)


def _fused_forward(x, pp, vmem_limit):
    n = x.shape[0]
    out_pad = pp["w3"].shape[1]
    args = (x, pp["w1"], pp["g1"], pp["be1"],
            pp["w2"], pp["g2"], pp["be2"], pp["w3"], pp["b3"])
    vmem_spec = pl.BlockSpec(memory_space=pltpu.MemorySpace.VMEM)
    return pl.pallas_call(
        _fused_mlp_kernel,
        out_shape=jax.ShapeDtypeStruct((n, out_pad), jnp.bfloat16),
        in_specs=[vmem_spec] * len(args),
        out_specs=vmem_spec,
        compiler_params=pltpu.CompilerParams(vmem_limit_bytes=vmem_limit),
    )(*args)


# ---------------------------------------------------------------------------
# Batch-tiled pipelined path (large / ragged N): 3 kernels, two-pass BN
# ---------------------------------------------------------------------------
def _lin_stats_kernel(x_ref, w_ref, h_ref, sum_ref, ssq_ref):
    """h = x(bf16) @ w; accumulate per-column sum / sum-of-squares over batch."""
    @pl.when(pl.program_id(0) == 0)
    def _():
        sum_ref[...] = jnp.zeros_like(sum_ref)
        ssq_ref[...] = jnp.zeros_like(ssq_ref)

    h = jnp.dot(x_ref[...].astype(w_ref.dtype), w_ref[...],
                preferred_element_type=jnp.float32)
    h_ref[...] = h.astype(h_ref.dtype)
    ones = jnp.ones((1, h.shape[0]), jnp.float32)
    sum_ref[...] += jnp.dot(ones, h, preferred_element_type=jnp.float32)
    ssq_ref[...] += jnp.dot(ones, h * h, preferred_element_type=jnp.float32)


def _bn_relu_lin_stats_kernel(h_in_ref, s_ref, t_ref, w_ref,
                              h_ref, sum_ref, ssq_ref, *, n_true, tile_rows):
    """hn = relu(h_in*s + t); h = hn(bf16) @ w; accumulate stats of h.
    Padded batch rows (>= n_true) are zeroed so they don't bias the BN stats."""
    @pl.when(pl.program_id(0) == 0)
    def _():
        sum_ref[...] = jnp.zeros_like(sum_ref)
        ssq_ref[...] = jnp.zeros_like(ssq_ref)

    hn = jnp.maximum(h_in_ref[...] * s_ref[...] + t_ref[...], 0.0)
    if n_true % tile_rows != 0:        # static: only emitted for ragged batches
        row = (lax.broadcasted_iota(jnp.int32, hn.shape, 0)
               + pl.program_id(0) * tile_rows)
        hn = jnp.where(row < n_true, hn, 0.0)

    h = jnp.dot(hn.astype(w_ref.dtype), w_ref[...],
                preferred_element_type=jnp.float32)
    h_ref[...] = h.astype(h_ref.dtype)
    ones = jnp.ones((1, h.shape[0]), jnp.float32)
    sum_ref[...] += jnp.dot(ones, h, preferred_element_type=jnp.float32)
    ssq_ref[...] += jnp.dot(ones, h * h, preferred_element_type=jnp.float32)


def _bn_relu_lin_tanh_kernel(h_in_ref, s_ref, t_ref, w_ref, b_ref, o_ref):
    hn = jnp.maximum(h_in_ref[...] * s_ref[...] + t_ref[...], 0.0)
    h = jnp.dot(hn.astype(w_ref.dtype), w_ref[...],
                preferred_element_type=jnp.float32) + b_ref[...]
    o_ref[...] = jnp.tanh(h).astype(o_ref.dtype)


def _tiled_forward(x, pp, vmem_limit, tile_rows):
    n, in_dim = x.shape
    h1_dim = pp["w1"].shape[1]     # 512
    h2_dim = pp["w2"].shape[1]     # 256
    out_pad = pp["w3"].shape[1]

    nt = pl.cdiv(n, tile_rows)
    n_pad = nt * tile_rows
    if n_pad != n:
        # zero rows contribute exactly 0 to the layer-1 stats (no bias)
        x = jnp.pad(x, ((0, n_pad - n), (0, 0)))

    acc_params = pltpu.CompilerParams(
        dimension_semantics=("arbitrary",),   # stats outputs are revisited accumulators
        vmem_limit_bytes=vmem_limit)
    par_params = pltpu.CompilerParams(
        dimension_semantics=("parallel",),
        vmem_limit_bytes=vmem_limit)

    def row_tiles(f):
        return pl.BlockSpec((tile_rows, f), lambda i: (i, 0))

    def resident(shape):
        return pl.BlockSpec(shape, lambda i: (0, 0))

    # ---- layer 1: Linear + batch stats --------------------------------------
    h1, sum1, ssq1 = pl.pallas_call(
        _lin_stats_kernel,
        grid=(nt,),
        in_specs=[row_tiles(in_dim), resident((in_dim, h1_dim))],
        out_specs=(row_tiles(h1_dim),
                   resident((1, h1_dim)), resident((1, h1_dim))),
        out_shape=(jax.ShapeDtypeStruct((n_pad, h1_dim), jnp.bfloat16),
                   jax.ShapeDtypeStruct((1, h1_dim), jnp.float32),
                   jax.ShapeDtypeStruct((1, h1_dim), jnp.float32)),
        compiler_params=acc_params,
    )(x, pp["w1"])
    s1, t1 = _bn_scale_shift(sum1, ssq1, n, pp["g1"], pp["be1"])

    # ---- layer 2: BN1+ReLU -> Linear + batch stats ---------------------------
    kern2 = functools.partial(_bn_relu_lin_stats_kernel,
                              n_true=n, tile_rows=tile_rows)
    h2, sum2, ssq2 = pl.pallas_call(
        kern2,
        grid=(nt,),
        in_specs=[row_tiles(h1_dim),
                  resident((1, h1_dim)), resident((1, h1_dim)),
                  resident((h1_dim, h2_dim))],
        out_specs=(row_tiles(h2_dim),
                   resident((1, h2_dim)), resident((1, h2_dim))),
        out_shape=(jax.ShapeDtypeStruct((n_pad, h2_dim), jnp.bfloat16),
                   jax.ShapeDtypeStruct((1, h2_dim), jnp.float32),
                   jax.ShapeDtypeStruct((1, h2_dim), jnp.float32)),
        compiler_params=acc_params,
    )(h1, s1, t1, pp["w2"])
    s2, t2 = _bn_scale_shift(sum2, ssq2, n, pp["g2"], pp["be2"])

    # ---- layer 3: BN2+ReLU -> Linear -> tanh ---------------------------------
    out = pl.pallas_call(
        _bn_relu_lin_tanh_kernel,
        grid=(nt,),
        in_specs=[row_tiles(h2_dim),
                  resident((1, h2_dim)), resident((1, h2_dim)),
                  resident((h2_dim, out_pad)), resident((1, out_pad))],
        out_specs=row_tiles(out_pad),
        out_shape=jax.ShapeDtypeStruct((n_pad, out_pad), jnp.bfloat16),
        compiler_params=par_params,
    )(h2, s2, t2, pp["w3"], pp["b3"])
    return out[:n]


# ---------------------------------------------------------------------------
# Public API
# ---------------------------------------------------------------------------
def prepare_params(params):
    """One-time weight prep (hoisted out of the per-call forward): bf16 MXU
    operands, w3/b3 zero-padded to a lane-dense (multiple of 128) width."""
    out_dim = params["w3"].shape[1]
    out_pad = _round_up(out_dim, LANE)
    pad = ((0, 0), (0, out_pad - out_dim))
    return {
        "w1": params["w1"].astype(jnp.bfloat16),
        "w2": params["w2"].astype(jnp.bfloat16),
        "w3": jnp.pad(params["w3"], pad).astype(jnp.bfloat16),
        "b3": jnp.pad(params["b3"], pad),
        "g1": params["g1"], "be1": params["be1"],
        "g2": params["g2"], "be2": params["be2"],
        "out_dim": out_dim,
    }


def model_a_forward(x, prepped, *, tile_rows=512, force_tiled=False):
    """x: (N, input_size) float32. prepped: output of prepare_params()."""
    n = x.shape[0]
    out_dim = prepped["out_dim"]
    vmem_limit = _vmem_limit_bytes()
    # rough fused-path budget: ~10 KB of live activations per batch row,
    # keep under half the scoped limit (headroom for compiler scratch).
    fused_fits = (not force_tiled) and (n * 10 * 1024 < vmem_limit // 2)
    if fused_fits:
        out = _fused_forward(x, prepped, vmem_limit)
    else:
        out = _tiled_forward(x, prepped, vmem_limit, tile_rows)
    # tiny (N, out_dim) slice + f32 upcast outside the kernel
    return out[:, :out_dim].astype(jnp.float32)


def init_params(key, input_size, output_size):
    """nn.Linear-style init (uniform ±1/sqrt(fan_in)); weights stored transposed
    as (fan_in, fan_out). BN: gamma=1, beta=0."""
    dims = [(input_size, 512), (512, 256), (256, output_size)]
    params = {}
    keys = jax.random.split(key, 6)
    for i, (fi, fo) in enumerate(dims, start=1):
        bound = 1.0 / (fi ** 0.5)
        params[f"w{i}"] = jax.random.uniform(
            keys[2 * (i - 1)], (fi, fo), jnp.float32, -bound, bound)
        params[f"b{i}"] = jax.random.uniform(
            keys[2 * (i - 1) + 1], (1, fo), jnp.float32, -bound, bound)
    params["g1"] = jnp.ones((1, 512), jnp.float32)
    params["be1"] = jnp.zeros((1, 512), jnp.float32)
    params["g2"] = jnp.ones((1, 256), jnp.float32)
    params["be2"] = jnp.zeros((1, 256), jnp.float32)
    return params


def reference_forward(x, params):
    """Pure-JAX f32 reference matching the PyTorch module (biases included)."""
    def bn_relu(h, g, b):
        mu = jnp.mean(h, axis=0, keepdims=True)
        var = jnp.mean((h - mu) ** 2, axis=0, keepdims=True)
        return jnp.maximum((h - mu) / jnp.sqrt(var + BN_EPS) * g + b, 0.0)

    h = x @ params["w1"] + params["b1"]
    h = bn_relu(h, params["g1"], params["be1"])
    h = h @ params["w2"] + params["b2"]
    h = bn_relu(h, params["g2"], params["be2"])
    h = h @ params["w3"] + params["b3"]
    return jnp.tanh(h)


if __name__ == "__main__":
    input_size, output_size, batch = 32, 16, 8

    key = jax.random.PRNGKey(0)
    k_params, k_x, k_x2 = jax.random.split(key, 3)
    params = init_params(k_params, input_size, output_size)
    prepped = prepare_params(params)           # one-time weight prep (hoisted)

    # --- small batch: fused whole-batch-resident kernel ----------------------
    x = jax.random.normal(k_x, (batch, input_size), jnp.float32)
    out = jax.block_until_ready(model_a_forward(x, prepped))
    ref = reference_forward(x, params)
    assert out.shape == (batch, output_size)
    # bf16 MXU operands / bf16 output -> relaxed tolerance vs the f32 reference.
    assert jnp.allclose(out, ref, atol=5e-2, rtol=5e-2), "fused path mismatch"

    # --- larger ragged batch: batch-tiled pipelined path (exercises masking) --
    n_big = 200
    x_big = jax.random.normal(k_x2, (n_big, input_size), jnp.float32)
    out_big = jax.block_until_ready(
        model_a_forward(x_big, prepped, tile_rows=128, force_tiled=True))
    ref_big = reference_forward(x_big, params)
    assert out_big.shape == (n_big, output_size)
    assert jnp.allclose(out_big, ref_big, atol=5e-2, rtol=5e-2), "tiled path mismatch"

    print("KERNEL_OK")
</pallas_src>

<mosaic_0001>
module attributes {stable_mosaic.version = 11 : i64} {
  func.func @_fused_mlp_kernel(%arg0: memref<8x32xf32, #tpu.memory_space<vmem>>, %arg1: memref<32x512xbf16, #tpu.memory_space<vmem>>, %arg2: memref<1x512xf32, #tpu.memory_space<vmem>>, %arg3: memref<1x512xf32, #tpu.memory_space<vmem>>, %arg4: memref<512x256xbf16, #tpu.memory_space<vmem>>, %arg5: memref<1x256xf32, #tpu.memory_space<vmem>>, %arg6: memref<1x256xf32, #tpu.memory_space<vmem>>, %arg7: memref<256x128xbf16, #tpu.memory_space<vmem>>, %arg8: memref<1x128xf32, #tpu.memory_space<vmem>>, %arg9: memref<8x128xbf16, #tpu.memory_space<vmem>>) attributes {dimension_semantics = [], scalar_prefetch = 0 : i64, scratch_operands = 0 : i64, tpu.core_type = #tpu.core_type<tc>} {
    %cst = arith.constant 1.000000e+00 : f32
    %0 = vector.broadcast %cst : f32 to vector<1x8xf32>
    %c0 = arith.constant 0 : index
    %c0_0 = arith.constant 0 : index
    %1 = vector.load %arg0[%c0, %c0_0] : memref<8x32xf32, #tpu.memory_space<vmem>>, vector<8x32xf32>
    %2 = arith.truncf %1 : vector<8x32xf32> to vector<8x32xbf16>
    %c0_1 = arith.constant 0 : index
    %c0_2 = arith.constant 0 : index
    %3 = vector.load %arg1[%c0_1, %c0_2] : memref<32x512xbf16, #tpu.memory_space<vmem>>, vector<32x512xbf16>
    %cst_3 = arith.constant dense<0.000000e+00> : vector<8x512xf32>
    %4 = tpu.matmul %2, %3, %cst_3 {dimension_numbers = #tpu.dot_dimension_numbers<[1], [0], [0], [1], [0, 0, 1, 1], [], []>} : vector<8x32xbf16>, vector<32x512xbf16>, vector<8x512xf32> -> vector<8x512xf32>
    %c0_4 = arith.constant 0 : index
    %c0_5 = arith.constant 0 : index
    %5 = vector.load %arg2[%c0_4, %c0_5] : memref<1x512xf32, #tpu.memory_space<vmem>>, vector<1x512xf32>
    %c0_6 = arith.constant 0 : index
    %c0_7 = arith.constant 0 : index
    %6 = vector.load %arg3[%c0_6, %c0_7] : memref<1x512xf32, #tpu.memory_space<vmem>>, vector<1x512xf32>
    %cst_8 = arith.constant dense<0.000000e+00> : vector<1x512xf32>
    %7 = tpu.matmul %0, %4, %cst_8 {dimension_numbers = #tpu.dot_dimension_numbers<[1], [0], [0], [1], [0, 0, 1, 1], [], []>} : vector<1x8xf32>, vector<8x512xf32>, vector<1x512xf32> -> vector<1x512xf32>
    %8 = arith.mulf %4, %4 : vector<8x512xf32>
    %cst_9 = arith.constant dense<0.000000e+00> : vector<1x512xf32>
    %9 = tpu.matmul %0, %8, %cst_9 {dimension_numbers = #tpu.dot_dimension_numbers<[1], [0], [0], [1], [0, 0, 1, 1], [], []>} : vector<1x8xf32>, vector<8x512xf32>, vector<1x512xf32> -> vector<1x512xf32>
    %cst_10 = arith.constant 1.250000e-01 : f32
    %10 = vector.broadcast %cst_10 : f32 to vector<1x512xf32>
    %11 = arith.mulf %7, %10 : vector<1x512xf32>
    %cst_11 = arith.constant 1.250000e-01 : f32
    %12 = vector.broadcast %cst_11 : f32 to vector<1x512xf32>
    %13 = arith.mulf %9, %12 : vector<1x512xf32>
    %14 = arith.mulf %11, %11 : vector<1x512xf32>
    %15 = arith.subf %13, %14 : vector<1x512xf32>
    %cst_12 = arith.constant 0.000000e+00 : f32
    %16 = vector.broadcast %cst_12 : f32 to vector<1x512xf32>
    %17 = arith.maximumf %15, %16 : vector<1x512xf32>
    %cst_13 = arith.constant 9.99999974E-6 : f32
    %18 = vector.broadcast %cst_13 : f32 to vector<1x512xf32>
    %19 = arith.addf %17, %18 : vector<1x512xf32>
    %20 = math.rsqrt %19 : vector<1x512xf32>
    %21 = arith.mulf %5, %20 : vector<1x512xf32>
    %22 = arith.mulf %11, %21 : vector<1x512xf32>
    %23 = arith.subf %6, %22 : vector<1x512xf32>
    %24 = vector.broadcast %21 : vector<1x512xf32> to vector<8x512xf32>
    %25 = arith.mulf %4, %24 : vector<8x512xf32>
    %26 = vector.broadcast %23 : vector<1x512xf32> to vector<8x512xf32>
    %27 = arith.addf %25, %26 : vector<8x512xf32>
    %cst_14 = arith.constant 0.000000e+00 : f32
    %28 = vector.broadcast %cst_14 : f32 to vector<8x512xf32>
    %29 = arith.maximumf %27, %28 : vector<8x512xf32>
    %30 = arith.truncf %29 : vector<8x512xf32> to vector<8x512xbf16>
    %c0_15 = arith.constant 0 : index
    %c0_16 = arith.constant 0 : index
    %31 = vector.load %arg4[%c0_15, %c0_16] : memref<512x256xbf16, #tpu.memory_space<vmem>>, vector<512x256xbf16>
    %cst_17 = arith.constant dense<0.000000e+00> : vector<8x256xf32>
    %32 = tpu.matmul %30, %31, %cst_17 {dimension_numbers = #tpu.dot_dimension_numbers<[1], [0], [0], [1], [0, 0, 1, 1], [], []>} : vector<8x512xbf16>, vector<512x256xbf16>, vector<8x256xf32> -> vector<8x256xf32>
    %c0_18 = arith.constant 0 : index
    %c0_19 = arith.constant 0 : index
    %33 = vector.load %arg5[%c0_18, %c0_19] : memref<1x256xf32, #tpu.memory_space<vmem>>, vector<1x256xf32>
    %c0_20 = arith.constant 0 : index
    %c0_21 = arith.constant 0 : index
    %34 = vector.load %arg6[%c0_20, %c0_21] : memref<1x256xf32, #tpu.memory_space<vmem>>, vector<1x256xf32>
    %cst_22 = arith.constant dense<0.000000e+00> : vector<1x256xf32>
    %35 = tpu.matmul %0, %32, %cst_22 {dimension_numbers = #tpu.dot_dimension_numbers<[1], [0], [0], [1], [0, 0, 1, 1], [], []>} : vector<1x8xf32>, vector<8x256xf32>, vector<1x256xf32> -> vector<1x256xf32>
    %36 = arith.mulf %32, %32 : vector<8x256xf32>
    %cst_23 = arith.constant dense<0.000000e+00> : vector<1x256xf32>
    %37 = tpu.matmul %0, %36, %cst_23 {dimension_numbers = #tpu.dot_dimension_numbers<[1], [0], [0], [1], [0, 0, 1, 1], [], []>} : vector<1x8xf32>, vector<8x256xf32>, vector<1x256xf32> -> vector<1x256xf32>
    %cst_24 = arith.constant 1.250000e-01 : f32
    %38 = vector.broadcast %cst_24 : f32 to vector<1x256xf32>
    %39 = arith.mulf %35, %38 : vector<1x256xf32>
    %cst_25 = arith.constant 1.250000e-01 : f32
    %40 = vector.broadcast %cst_25 : f32 to vector<1x256xf32>
    %41 = arith.mulf %37, %40 : vector<1x256xf32>
    %42 = arith.mulf %39, %39 : vector<1x256xf32>
    %43 = arith.subf %41, %42 : vector<1x256xf32>
    %cst_26 = arith.constant 0.000000e+00 : f32
    %44 = vector.broadcast %cst_26 : f32 to vector<1x256xf32>
    %45 = arith.maximumf %43, %44 : vector<1x256xf32>
    %cst_27 = arith.constant 9.99999974E-6 : f32
    %46 = vector.broadcast %cst_27 : f32 to vector<1x256xf32>
    %47 = arith.addf %45, %46 : vector<1x256xf32>
    %48 = math.rsqrt %47 : vector<1x256xf32>
    %49 = arith.mulf %33, %48 : vector<1x256xf32>
    %50 = arith.mulf %39, %49 : vector<1x256xf32>
    %51 = arith.subf %34, %50 : vector<1x256xf32>
    %52 = vector.broadcast %49 : vector<1x256xf32> to vector<8x256xf32>
    %53 = arith.mulf %32, %52 : vector<8x256xf32>
    %54 = vector.broadcast %51 : vector<1x256xf32> to vector<8x256xf32>
    %55 = arith.addf %53, %54 : vector<8x256xf32>
    %cst_28 = arith.constant 0.000000e+00 : f32
    %56 = vector.broadcast %cst_28 : f32 to vector<8x256xf32>
    %57 = arith.maximumf %55, %56 : vector<8x256xf32>
    %58 = arith.truncf %57 : vector<8x256xf32> to vector<8x256xbf16>
    %c0_29 = arith.constant 0 : index
    %c0_30 = arith.constant 0 : index
    %59 = vector.load %arg7[%c0_29, %c0_30] : memref<256x128xbf16, #tpu.memory_space<vmem>>, vector<256x128xbf16>
    %cst_31 = arith.constant dense<0.000000e+00> : vector<8x128xf32>
    %60 = tpu.matmul %58, %59, %cst_31 {dimension_numbers = #tpu.dot_dimension_numbers<[1], [0], [0], [1], [0, 0, 1, 1], [], []>} : vector<8x256xbf16>, vector<256x128xbf16>, vector<8x128xf32> -> vector<8x128xf32>
    %c0_32 = arith.constant 0 : index
    %c0_33 = arith.constant 0 : index
    %61 = vector.load %arg8[%c0_32, %c0_33] : memref<1x128xf32, #tpu.memory_space<vmem>>, vector<1x128xf32>
    %62 = vector.broadcast %61 : vector<1x128xf32> to vector<8x128xf32>
    %63 = arith.addf %60, %62 : vector<8x128xf32>
    %64 = math.tanh %63 : vector<8x128xf32>
    %65 = arith.truncf %64 : vector<8x128xf32> to vector<8x128xbf16>
    %c0_34 = arith.constant 0 : index
    %c0_35 = arith.constant 0 : index
    %66 = vector.load %arg9[%c0_34, %c0_35] : memref<8x128xbf16, #tpu.memory_space<vmem>>, vector<8x128xbf16>
    tpu.vector_store %arg9[%c0_34, %c0_35], %65 {strides = array<i32>} : memref<8x128xbf16, #tpu.memory_space<vmem>>, vector<8x128xbf16>,
    return
  }
}

</mosaic_0001>

<llo_original>
// kernel: tpu_custom_call.1
$region0: #{tpu_custom_call.1}
  #allocation0 [shape = 'u32[]', space=smem, size = 0x4, offset = 0x4, fixed_abs, tag = 'smem constant byte address 0x4 - core index']
  #allocation1 [shape = 'u32[144,128]{1,0:T(1,128)}', space=vmem, size = 0x12000, scoped, tag = 'internal scratch']
  %s0 = inlined_call_operand.hbm [shape: f32[8,32], index: 0, kind: input, shape index: {}]
  %s1 = inlined_call_operand.hbm [shape: bf16[32,512], index: 1, kind: input, shape index: {}]
  %s2 = inlined_call_operand.vmem [shape: f32[1,512], index: 2, kind: input, shape index: {}]
  %s3 = inlined_call_operand.vmem [shape: f32[1,512], index: 3, kind: input, shape index: {}]
  %s4 = inlined_call_operand.hbm [shape: bf16[512,256], index: 4, kind: input, shape index: {}]
  %s5 = inlined_call_operand.vmem [shape: f32[1,256], index: 5, kind: input, shape index: {}]
  %s6 = inlined_call_operand.vmem [shape: f32[1,256], index: 6, kind: input, shape index: {}]
  %s7 = inlined_call_operand.hbm [shape: bf16[256,128], index: 7, kind: input, shape index: {}]
  %s8 = inlined_call_operand.vmem [shape: f32[1,128], index: 8, kind: input, shape index: {}]
  %s9 = inlined_call_operand.hbm [shape: bf16[8,128], index: 9, kind: output, shape index: {}]
  %s10 = sld [smem:[#allocation0]]
  $region62: #{tpu_custom_call.1} parent=0
    _
  %s12 = ssub.s32 1, %s10
  %s13 = scalar_select 0, %s12, %s10
  $region1: #{tpu_custom_call.1} parent=0
    #allocation2 [shape = 'u8[4096]{0}', space=vmem, size = 0x1000, scoped, tag = 'input window, operand 0, single buffered']
    #allocation3 [shape = 's32[1]{0}', space=sflag, size = 0x4, scoped, tag = 'scoped memory for tpu_custom_call.1']
    #allocation4 [shape = 's32[1]{0}', space=sflag, size = 0x4, scoped, tag = 'scoped memory for tpu_custom_call.1']
    #allocation5 [shape = 'u8[32768]{0}', space=vmem, size = 0x8000, scoped, tag = 'input window, operand 1, single buffered']
    #allocation6 [shape = 's32[1]{0}', space=sflag, size = 0x4, scoped, tag = 'scoped memory for tpu_custom_call.1']
    #allocation7 [shape = 'u8[262144]{0}', space=vmem, size = 0x40000, scoped, tag = 'input window, operand 4, single buffered']
    #allocation8 [shape = 'u8[65536]{0}', space=vmem, size = 0x10000, scoped, tag = 'input window, operand 7, single buffered']
    #allocation9 [shape = 's32[1]{0}', space=sflag, size = 0x4, scoped, tag = 'scoped memory for tpu_custom_call.1']
    #allocation10 [shape = 'u8[2048]{0}', space=vmem, size = 0x800, scoped, tag = 'output window, operand 0, single buffered']
    %14 = vsyncpa [#allocation3], 0
    %15 = vsyncpa [#allocation6], 0
    %16 = vsyncpa [#allocation9], 0
    %17 = vsyncpa [#allocation4], 0
    // Predicated region
    $region2: #{tpu_custom_call.1} parent=1 // pred_check
      _
    $region3: #{tpu_custom_call.1} parent=1 // pred_check_branch
      %19 = sbr.rel (0) target = $region5
    $region4: #{tpu_custom_call.1} parent=1 // pred_region
      %s21 = ssub.s32 128, 128
      %22 = vsyncadd [#allocation3], %s21
      %s24 = sshll.u32 [#allocation2], 4
      %s25 = int_to_ptr.vmem [resolvable:$true] %s24
      %27 = dma.hbm_to_vmem [thread:$0]  %s0, 128, %s25, [#allocation3]
    $region5: #{tpu_custom_call.1} parent=1 // pred_fallthru
      _
    // Predicated region
    $region6: #{tpu_custom_call.1} parent=1 // pred_check
      _
    $region7: #{tpu_custom_call.1} parent=1 // pred_check_branch
      %29 = sbr.rel (0) target = $region9
    $region8: #{tpu_custom_call.1} parent=1 // pred_region
      %s31 = ssub.s32 1024, 1024
      %32 = vsyncadd [#allocation6], %s31
      %s33 = sshll.u32 [#allocation5], 4
      %s34 = int_to_ptr.vmem [resolvable:$true] %s33
      %39 = dma.hbm_to_vmem [thread:$0]  %s1, 1024, %s34, [#allocation6], 256, 256, 16
    $region9: #{tpu_custom_call.1} parent=1 // pred_fallthru
      _
    // Predicated region
    $region10: #{tpu_custom_call.1} parent=1 // pred_check
      _
    $region11: #{tpu_custom_call.1} parent=1 // pred_check_branch
      %41 = sbr.rel (0) target = $region13
    $region12: #{tpu_custom_call.1} parent=1 // pred_region
      _
    $region13: #{tpu_custom_call.1} parent=1 // pred_fallthru
      _
    // Predicated region
    $region14: #{tpu_custom_call.1} parent=1 // pred_check
      _
    $region15: #{tpu_custom_call.1} parent=1 // pred_check_branch
      %43 = sbr.rel (0) target = $region17
    $region16: #{tpu_custom_call.1} parent=1 // pred_region
      _
    $region17: #{tpu_custom_call.1} parent=1 // pred_fallthru
      _
    // Predicated region
    $region18: #{tpu_custom_call.1} parent=1 // pred_check
      _
    $region19: #{tpu_custom_call.1} parent=1 // pred_check_branch
      %45 = sbr.rel (0) target = $region21
    $region20: #{tpu_custom_call.1} parent=1 // pred_region
      %s47 = ssub.s32 8192, 8192
      %48 = vsyncadd [#allocation6], %s47
      %s49 = sshll.u32 [#allocation7], 4
      %s50 = int_to_ptr.vmem [resolvable:$true] %s49
      %55 = dma.hbm_to_vmem [thread:$0]  %s4, 8192, %s50, [#allocation6], 128, 128, 8
    $region21: #{tpu_custom_call.1} parent=1 // pred_fallthru
      _
    // Predicated region
    $region22: #{tpu_custom_call.1} parent=1 // pred_check
      _
    $region23: #{tpu_custom_call.1} parent=1 // pred_check_branch
      %57 = sbr.rel (0) target = $region25
    $region24: #{tpu_custom_call.1} parent=1 // pred_region
      _
    $region25: #{tpu_custom_call.1} parent=1 // pred_fallthru
      _
    // Predicated region
    $region26: #{tpu_custom_call.1} parent=1 // pred_check
      _
    $region27: #{tpu_custom_call.1} parent=1 // pred_check_branch
      %59 = sbr.rel (0) target = $region29
    $region28: #{tpu_custom_call.1} parent=1 // pred_region
      _
    $region29: #{tpu_custom_call.1} parent=1 // pred_fallthru
      _
    // Predicated region
    $region30: #{tpu_custom_call.1} parent=1 // pred_check
      _
    $region31: #{tpu_custom_call.1} parent=1 // pred_check_branch
      %61 = sbr.rel (0) target = $region33
    $region32: #{tpu_custom_call.1} parent=1 // pred_region
      %s63 = ssub.s32 2048, 2048
      %64 = vsyncadd [#allocation9], %s63
      %s65 = sshll.u32 [#allocation8], 4
      %s66 = int_to_ptr.vmem [resolvable:$true] %s65
      %71 = dma.hbm_to_vmem [thread:$0]  %s7, 2048, %s66, [#allocation9], 64, 64, 4
    $region33: #{tpu_custom_call.1} parent=1 // pred_fallthru
      _
    // Predicated region
    $region34: #{tpu_custom_call.1} parent=1 // pred_check
      _
    $region35: #{tpu_custom_call.1} parent=1 // pred_check_branch
      %73 = sbr.rel (0) target = $region37
    $region36: #{tpu_custom_call.1} parent=1 // pred_region
      _
    $region37: #{tpu_custom_call.1} parent=1 // pred_fallthru
      _
    // Predicated region
    $region38: #{tpu_custom_call.1} parent=1 // pred_check
      _
    $region39: #{tpu_custom_call.1} parent=1 // pred_check_branch
      %75 = sbr.rel (0) target = $region41
    $region40: #{tpu_custom_call.1} parent=1 // pred_region
      %76 = dma.done [#allocation3], 128
    $region41: #{tpu_custom_call.1} parent=1 // pred_fallthru
      _
    // Predicated region
    $region42: #{tpu_custom_call.1} parent=1 // pred_check
      _
    $region43: #{tpu_custom_call.1} parent=1 // pred_check_branch
      %78 = sbr.rel (0) target = $region45
    $region44: #{tpu_custom_call.1} parent=1 // pred_region
      %79 = dma.done [#allocation6], 1024
    $region45: #{tpu_custom_call.1} parent=1 // pred_fallthru
      _
    // Predicated region
    $region46: #{tpu_custom_call.1} parent=1 // pred_check
      _
    $region47: #{tpu_custom_call.1} parent=1 // pred_check_branch
      %81 = sbr.rel (0) target = $region49
    $region48: #{tpu_custom_call.1} parent=1 // pred_region
      %82 = dma.done [#allocation6], 8192
    $region49: #{tpu_custom_call.1} parent=1 // pred_fallthru
      _
    // Predicated region
    $region50: #{tpu_custom_call.1} parent=1 // pred_check
      _
    $region51: #{tpu_custom_call.1} parent=1 // pred_check_branch
      %84 = sbr.rel (0) target = $region53
    $region52: #{tpu_custom_call.1} parent=1 // pred_region
      %85 = dma.done [#allocation9], 2048
    $region53: #{tpu_custom_call.1} parent=1 // pred_fallthru
      _
    %v87 = vld [vmem:[#allocation2] sm:$0xff]
    %v88 = vpack.c.bf16 %v87, %v87
    %v89 = vld [vmem:[#allocation5] sm:$0xff]
    %v90 = vld [vmem:[#allocation5 + $0x8] sm:$0xff]
    %v91 = vld [vmem:[#allocation5 + $0x10] sm:$0xff]
    %v92 = vld [vmem:[#allocation5 + $0x18] sm:$0xff]
    %v93 = vld [vmem:[#allocation5 + $0x20] sm:$0xff]
    %v94 = vld [vmem:[#allocation5 + $0x28] sm:$0xff]
    %v95 = vld [vmem:[#allocation5 + $0x30] sm:$0xff]
    %v96 = vld [vmem:[#allocation5 + $0x38] sm:$0xff]
    %v105 = vunpack.c.l.b16 %v89
    %v106 = vunpack.c.h.b16 %v89
    %v107 = vunpack.c.l.b16 %v90
    %v108 = vunpack.c.h.b16 %v90
    %v109 = vunpack.c.l.b16 %v91
    %v110 = vunpack.c.h.b16 %v91
    %v111 = vunpack.c.l.b16 %v92
    %v112 = vunpack.c.h.b16 %v92
    %v113 = vunpack.c.l.b16 %v93
    %v114 = vunpack.c.h.b16 %v93
    %v115 = vunpack.c.l.b16 %v94
    %v116 = vunpack.c.h.b16 %v94
    %v117 = vunpack.c.l.b16 %v95
    %v118 = vunpack.c.h.b16 %v95
    %v119 = vunpack.c.l.b16 %v96
    %v120 = vunpack.c.h.b16 %v96
    %v121 = vpack.c.b16 %v109, %v105
    %v122 = vpack.c.b16 %v110, %v106
    %v123 = vpack.c.b16 %v111, %v107
    %v124 = vpack.c.b16 %v112, %v108
    %v125 = vpack.c.b16 %v117, %v113
    %v126 = vpack.c.b16 %v118, %v114
    %v127 = vpack.c.b16 %v119, %v115
    %v128 = vpack.c.b16 %v120, %v116
    %vm137 = vcmask 261120
    %v139 = vsel %vm137, %v88, 0
    %141 = vmatprep.subr.bf16.mxu0 %v122
    %142 = vmatpush1.bf16.msra.mxu0 %v121
    %143 = vmatprep.subr.bf16.mxu0 %v126
    %144 = vmatpush1.bf16.msra.mxu0 %v125
    %145 = vmatprep.subr.bf16.mxu0 0
    %146 = vmatpush1.bf16.msra.mxu0 0
    %147 = vmatprep.subr.bf16.mxu0 0
    %148 = vmatpush1.bf16.msra.mxu0 0
    %149 = vmatprep.subr.bf16.mxu0 0
    %150 = vmatpush1.bf16.msra.mxu0 0
    %151 = vmatprep.subr.bf16.mxu0 0
    %152 = vmatpush1.bf16.msra.mxu0 0
    %153 = vmatprep.subr.bf16.mxu0 0
    %154 = vmatpush1.bf16.msra.mxu0 0
    %155 = vmatprep.subr.bf16.mxu0 0
    %156 = vmatpush1.bf16.msra.mxu0 0
    %157 = vmatprep.subr.bf16.mxu0 0
    %158 = vmatpush1.bf16.msra.mxu0 0
    %159 = vmatprep.subr.bf16.mxu0 0
    %160 = vmatpush1.bf16.msra.mxu0 0
    %161 = vmatprep.subr.bf16.mxu0 0
    %162 = vmatpush1.bf16.msra.mxu0 0
    %163 = vmatprep.subr.bf16.mxu0 0
    %164 = vmatpush1.bf16.msra.mxu0 0
    %165 = vmatprep.subr.bf16.mxu0 0
    %166 = vmatpush1.bf16.msra.mxu0 0
    %167 = vmatprep.subr.bf16.mxu0 0
    %168 = vmatpush1.bf16.msra.mxu0 0
    %169 = vmatprep.subr.bf16.mxu0 0
    %170 = vmatpush1.bf16.msra.mxu0 0
    %171 = vmatprep.subr.bf16.mxu0 0
    %172 = vmatpush1.bf16.msra.mxu0 0
    %173 = vmatprep.mubr.bf16.mxu0 0
    %174 = vmatmul.mubr.bf16.gmra.mrb[0].mxu0 %v139
    %v175 = vpop.f32.mrb[0].mxu0
    %v176 = vadd.f32 0.0, %v175
    %v177 = vpop.f32.mrb[0].mxu0
    %v178 = vadd.f32 0.0, %v177
    %v179 = vpop.f32.mrb[0].mxu0
    %v180 = vpop.f32.mrb[0].mxu0
    %181 = vdwg.mxu0
    %182 = vmatprep.subr.bf16.mxu0 %v124
    %183 = vmatpush1.bf16.msra.mxu0 %v123
    %184 = vmatprep.subr.bf16.mxu0 %v128
    %185 = vmatpush1.bf16.msra.mxu0 %v127
    %186 = vmatprep.subr.bf16.mxu0 0
    %187 = vmatpush1.bf16.msra.mxu0 0
    %188 = vmatprep.subr.bf16.mxu0 0
    %189 = vmatpush1.bf16.msra.mxu0 0
    %190 = vmatprep.subr.bf16.mxu0 0
    %191 = vmatpush1.bf16.msra.mxu0 0
    %192 = vmatprep.subr.bf16.mxu0 0
    %193 = vmatpush1.bf16.msra.mxu0 0
    %194 = vmatprep.subr.bf16.mxu0 0
    %195 = vmatpush1.bf16.msra.mxu0 0
    %196 = vmatprep.subr.bf16.mxu0 0
    %197 = vmatpush1.bf16.msra.mxu0 0
    %198 = vmatprep.subr.bf16.mxu0 0
    %199 = vmatpush1.bf16.msra.mxu0 0
    %200 = vmatprep.subr.bf16.mxu0 0
    %201 = vmatpush1.bf16.msra.mxu0 0
    %202 = vmatprep.subr.bf16.mxu0 0
    %203 = vmatpush1.bf16.msra.mxu0 0
    %204 = vmatprep.subr.bf16.mxu0 0
    %205 = vmatpush1.bf16.msra.mxu0 0
    %206 = vmatprep.subr.bf16.mxu0 0
    %207 = vmatpush1.bf16.msra.mxu0 0
    %208 = vmatprep.subr.bf16.mxu0 0
    %209 = vmatpush1.bf16.msra.mxu0 0
    %210 = vmatprep.subr.bf16.mxu0 0
    %211 = vmatpush1.bf16.msra.mxu0 0
    %212 = vmatprep.subr.bf16.mxu0 0
    %213 = vmatpush1.bf16.msra.mxu0 0
    %214 = vmatprep.mubr.bf16.mxu0 0
    %215 = vmatmul.mubr.bf16.gmra.mrb[0].mxu0 %v139
    %v216 = vpop.f32.mrb[0].mxu0
    %v217 = vadd.f32 0.0, %v216
    %v218 = vpop.f32.mrb[0].mxu0
    %v219 = vadd.f32 0.0, %v218
    %v220 = vpop.f32.mrb[0].mxu0
    %v221 = vpop.f32.mrb[0].mxu0
    %222 = vdwg.mxu0
    %v223 = vld [vmem:[%s2] sm:$0xf]
    %v224 = vld [vmem:[%s3] sm:$0xf]
    %vm225 = vcmask 64512
    %v227 = vsel %vm225, 1.0, 0
    %229 = vmatprep.subr.mxu0 %v178
    %230 = vmatpush1.msra.mxu0 %v176
    %231 = vmatprep.subr.mxu0 0.0
    %232 = vmatpush1.msra.mxu0 0.0
    %233 = vmatprep.subr.mxu0 0.0
    %234 = vmatpush1.msra.mxu0 0.0
    %235 = vmatprep.subr.mxu0 0.0
    %236 = vmatpush1.msra.mxu0 0.0
    %237 = vmatprep.subr.mxu0 0.0
    %238 = vmatpush1.msra.mxu0 0.0
    %239 = vmatprep.subr.mxu0 0.0
    %240 = vmatpush1.msra.mxu0 0.0
    %241 = vmatprep.subr.mxu0 0.0
    %242 = vmatpush1.msra.mxu0 0.0
    %243 = vmatprep.subr.mxu0 0.0
    %244 = vmatpush1.msra.mxu0 0.0
    %245 = vmatprep.subr.mxu0 0.0
    %246 = vmatpush1.msra.mxu0 0.0
    %247 = vmatprep.subr.mxu0 0.0
    %248 = vmatpush1.msra.mxu0 0.0
    %249 = vmatprep.subr.mxu0 0.0
    %250 = vmatpush1.msra.mxu0 0.0
    %251 = vmatprep.subr.mxu0 0.0
    %252 = vmatpush1.msra.mxu0 0.0
    %253 = vmatprep.subr.mxu0 0.0
    %254 = vmatpush1.msra.mxu0 0.0
    %255 = vmatprep.subr.mxu0 0.0
    %256 = vmatpush1.msra.mxu0 0.0
    %257 = vmatprep.subr.mxu0 0.0
    %258 = vmatpush1.msra.mxu0 0.0
    %259 = vmatprep.subr.mxu0 0.0
    %260 = vmatpush1.msra.mxu0 0.0
    %261 = vmatprep.subr.mxu0 0.0
    %262 = vmatpush1.msra.mxu0 0.0
    %263 = vmatprep.subr.mxu0 0.0
    %264 = vmatpush1.msra.mxu0 0.0
    %265 = vmatprep.subr.mxu0 0.0
    %266 = vmatpush1.msra.mxu0 0.0
    %267 = vmatprep.subr.mxu0 0.0
    %268 = vmatpush1.msra.mxu0 0.0
    %269 = vmatprep.subr.mxu0 0.0
    %270 = vmatpush1.msra.mxu0 0.0
    %271 = vmatprep.subr.mxu0 0.0
    %272 = vmatpush1.msra.mxu0 0.0
    %273 = vmatprep.subr.mxu0 0.0
    %274 = vmatpush1.msra.mxu0 0.0
    %275 = vmatprep.subr.mxu0 0.0
    %276 = vmatpush1.msra.mxu0 0.0
    %277 = vmatprep.subr.mxu0 0.0
    %278 = vmatpush1.msra.mxu0 0.0
    %279 = vmatprep.subr.mxu0 0.0
    %280 = vmatpush1.msra.mxu0 0.0
    %281 = vmatprep.subr.mxu0 0.0
    %282 = vmatpush1.msra.mxu0 0.0
    %283 = vmatprep.subr.mxu0 0.0
    %284 = vmatpush1.msra.mxu0 0.0
    %285 = vmatprep.subr.mxu0 0.0
    %286 = vmatpush1.msra.mxu0 0.0
    %287 = vmatprep.subr.mxu0 0.0
    %288 = vmatpush1.msra.mxu0 0.0
    %289 = vmatprep.subr.mxu0 0.0
    %290 = vmatpush1.msra.mxu0 0.0
    %291 = vmatprep.subr.mxu0 0.0
    %292 = vmatpush1.msra.mxu0 0.0
    %293 = vmatprep.mubr.f32.mxu0 0.0
    %294 = vmatmul.mubr.f32.gmra.mrb[0].mxu0 %v227
    %v295 = vpop.f32.mrb[0].mxu0
    %v296 = vadd.f32 0.0, %v295
    %v297 = vpop.f32.mrb[0].mxu0
    %v298 = vadd.f32 0.0, %v297
    %299 = vdwg.mxu0
    %300 = vmatprep.subr.mxu0 %v219
    %301 = vmatpush1.msra.mxu0 %v217
    %302 = vmatprep.subr.mxu0 0.0
    %303 = vmatpush1.msra.mxu0 0.0
    %304 = vmatprep.subr.mxu0 0.0
    %305 = vmatpush1.msra.mxu0 0.0
    %306 = vmatprep.subr.mxu0 0.0
    %307 = vmatpush1.msra.mxu0 0.0
    %308 = vmatprep.subr.mxu0 0.0
    %309 = vmatpush1.msra.mxu0 0.0
    %310 = vmatprep.subr.mxu0 0.0
    %311 = vmatpush1.msra.mxu0 0.0
    %312 = vmatprep.subr.mxu0 0.0
    %313 = vmatpush1.msra.mxu0 0.0
    %314 = vmatprep.subr.mxu0 0.0
    %315 = vmatpush1.msra.mxu0 0.0
    %316 = vmatprep.subr.mxu0 0.0
    %317 = vmatpush1.msra.mxu0 0.0
    %318 = vmatprep.subr.mxu0 0.0
    %319 = vmatpush1.msra.mxu0 0.0
    %320 = vmatprep.subr.mxu0 0.0
    %321 = vmatpush1.msra.mxu0 0.0
    %322 = vmatprep.subr.mxu0 0.0
    %323 = vmatpush1.msra.mxu0 0.0
    %324 = vmatprep.subr.mxu0 0.0
    %325 = vmatpush1.msra.mxu0 0.0
    %326 = vmatprep.subr.mxu0 0.0
    %327 = vmatpush1.msra.mxu0 0.0
    %328 = vmatprep.subr.mxu0 0.0
    %329 = vmatpush1.msra.mxu0 0.0
    %330 = vmatprep.subr.mxu0 0.0
    %331 = vmatpush1.msra.mxu0 0.0
    %332 = vmatprep.subr.mxu0 0.0
    %333 = vmatpush1.msra.mxu0 0.0
    %334 = vmatprep.subr.mxu0 0.0
    %335 = vmatpush1.msra.mxu0 0.0
    %336 = vmatprep.subr.mxu0 0.0
    %337 = vmatpush1.msra.mxu0 0.0
    %338 = vmatprep.subr.mxu0 0.0
    %339 = vmatpush1.msra.mxu0 0.0
    %340 = vmatprep.subr.mxu0 0.0
    %341 = vmatpush1.msra.mxu0 0.0
    %342 = vmatprep.subr.mxu0 0.0
    %343 = vmatpush1.msra.mxu0 0.0
    %344 = vmatprep.subr.mxu0 0.0
    %345 = vmatpush1.msra.mxu0 0.0
    %346 = vmatprep.subr.mxu0 0.0
    %347 = vmatpush1.msra.mxu0 0.0
    %348 = vmatprep.subr.mxu0 0.0
    %349 = vmatpush1.msra.mxu0 0.0
    %350 = vmatprep.subr.mxu0 0.0
    %351 = vmatpush1.msra.mxu0 0.0
    %352 = vmatprep.subr.mxu0 0.0
    %353 = vmatpush1.msra.mxu0 0.0
    %354 = vmatprep.subr.mxu0 0.0
    %355 = vmatpush1.msra.mxu0 0.0
    %356 = vmatprep.subr.mxu0 0.0
    %357 = vmatpush1.msra.mxu0 0.0
    %358 = vmatprep.subr.mxu0 0.0
    %359 = vmatpush1.msra.mxu0 0.0
    %360 = vmatprep.subr.mxu0 0.0
    %361 = vmatpush1.msra.mxu0 0.0
    %362 = vmatprep.subr.mxu0 0.0
    %363 = vmatpush1.msra.mxu0 0.0
    %364 = vmatprep.mubr.f32.mxu0 0.0
    %365 = vmatmul.mubr.f32.gmra.mrb[0].mxu0 %v227
    %v366 = vpop.f32.mrb[0].mxu0
    %v367 = vadd.f32 0.0, %v366
    %v368 = vpop.f32.mrb[0].mxu0
    %v369 = vadd.f32 0.0, %v368
    %370 = vdwg.mxu0
    %v371 = vmul.f32 %v176, %v176
    %v372 = vmul.f32 %v178, %v178
    %v373 = vmul.f32 %v217, %v217
    %v374 = vmul.f32 %v219, %v219
    %375 = vmatprep.subr.mxu0 %v372
    %376 = vmatpush1.msra.mxu0 %v371
    %377 = vmatprep.subr.mxu0 0.0
    %378 = vmatpush1.msra.mxu0 0.0
    %379 = vmatprep.subr.mxu0 0.0
    %380 = vmatpush1.msra.mxu0 0.0
    %381 = vmatprep.subr.mxu0 0.0
    %382 = vmatpush1.msra.mxu0 0.0
    %383 = vmatprep.subr.mxu0 0.0
    %384 = vmatpush1.msra.mxu0 0.0
    %385 = vmatprep.subr.mxu0 0.0
    %386 = vmatpush1.msra.mxu0 0.0
    %387 = vmatprep.subr.mxu0 0.0
    %388 = vmatpush1.msra.mxu0 0.0
    %389 = vmatprep.subr.mxu0 0.0
    %390 = vmatpush1.msra.mxu0 0.0
    %391 = vmatprep.subr.mxu0 0.0
    %392 = vmatpush1.msra.mxu0 0.0
    %393 = vmatprep.subr.mxu0 0.0
    %394 = vmatpush1.msra.mxu0 0.0
    %395 = vmatprep.subr.mxu0 0.0
    %396 = vmatpush1.msra.mxu0 0.0
    %397 = vmatprep.subr.mxu0 0.0
    %398 = vmatpush1.msra.mxu0 0.0
    %399 = vmatprep.subr.mxu0 0.0
    %400 = vmatpush1.msra.mxu0 0.0
    %401 = vmatprep.subr.mxu0 0.0
    %402 = vmatpush1.msra.mxu0 0.0
    %403 = vmatprep.subr.mxu0 0.0
    %404 = vmatpush1.msra.mxu0 0.0
    %405 = vmatprep.subr.mxu0 0.0
    %406 = vmatpush1.msra.mxu0 0.0
    %407 = vmatprep.subr.mxu0 0.0
    %408 = vmatpush1.msra.mxu0 0.0
    %409 = vmatprep.subr.mxu0 0.0
    %410 = vmatpush1.msra.mxu0 0.0
    %411 = vmatprep.subr.mxu0 0.0
    %412 = vmatpush1.msra.mxu0 0.0
    %413 = vmatprep.subr.mxu0 0.0
    %414 = vmatpush1.msra.mxu0 0.0
    %415 = vmatprep.subr.mxu0 0.0
    %416 = vmatpush1.msra.mxu0 0.0
    %417 = vmatprep.subr.mxu0 0.0
    %418 = vmatpush1.msra.mxu0 0.0
    %419 = vmatprep.subr.mxu0 0.0
    %420 = vmatpush1.msra.mxu0 0.0
    %421 = vmatprep.subr.mxu0 0.0
    %422 = vmatpush1.msra.mxu0 0.0
    %423 = vmatprep.subr.mxu0 0.0
    %424 = vmatpush1.msra.mxu0 0.0
    %425 = vmatprep.subr.mxu0 0.0
    %426 = vmatpush1.msra.mxu0 0.0
    %427 = vmatprep.subr.mxu0 0.0
    %428 = vmatpush1.msra.mxu0 0.0
    %429 = vmatprep.subr.mxu0 0.0
    %430 = vmatpush1.msra.mxu0 0.0
    %431 = vmatprep.subr.mxu0 0.0
    %432 = vmatpush1.msra.mxu0 0.0
    %433 = vmatprep.subr.mxu0 0.0
    %434 = vmatpush1.msra.mxu0 0.0
    %435 = vmatprep.subr.mxu0 0.0
    %436 = vmatpush1.msra.mxu0 0.0
    %437 = vmatprep.subr.mxu0 0.0
    %438 = vmatpush1.msra.mxu0 0.0
    %439 = vmatprep.mubr.f32.mxu0 0.0
    %440 = vmatmul.mubr.f32.gmra.mrb[0].mxu0 %v227
    %v441 = vpop.f32.mrb[0].mxu0
    %v442 = vadd.f32 0.0, %v441
    %v443 = vpop.f32.mrb[0].mxu0
    %v444 = vadd.f32 0.0, %v443
    %445 = vdwg.mxu0
    %446 = vmatprep.subr.mxu0 %v374
    %447 = vmatpush1.msra.mxu0 %v373
    %448 = vmatprep.subr.mxu0 0.0
    %449 = vmatpush1.msra.mxu0 0.0
    %450 = vmatprep.subr.mxu0 0.0
    %451 = vmatpush1.msra.mxu0 0.0
    %452 = vmatprep.subr.mxu0 0.0
    %453 = vmatpush1.msra.mxu0 0.0
    %454 = vmatprep.subr.mxu0 0.0
    %455 = vmatpush1.msra.mxu0 0.0
    %456 = vmatprep.subr.mxu0 0.0
    %457 = vmatpush1.msra.mxu0 0.0
    %458 = vmatprep.subr.mxu0 0.0
    %459 = vmatpush1.msra.mxu0 0.0
    %460 = vmatprep.subr.mxu0 0.0
    %461 = vmatpush1.msra.mxu0 0.0
    %462 = vmatprep.subr.mxu0 0.0
    %463 = vmatpush1.msra.mxu0 0.0
    %464 = vmatprep.subr.mxu0 0.0
    %465 = vmatpush1.msra.mxu0 0.0
    %466 = vmatprep.subr.mxu0 0.0
    %467 = vmatpush1.msra.mxu0 0.0
    %468 = vmatprep.subr.mxu0 0.0
    %469 = vmatpush1.msra.mxu0 0.0
    %470 = vmatprep.subr.mxu0 0.0
    %471 = vmatpush1.msra.mxu0 0.0
    %472 = vmatprep.subr.mxu0 0.0
    %473 = vmatpush1.msra.mxu0 0.0
    %474 = vmatprep.subr.mxu0 0.0
    %475 = vmatpush1.msra.mxu0 0.0
    %476 = vmatprep.subr.mxu0 0.0
    %477 = vmatpush1.msra.mxu0 0.0
    %478 = vmatprep.subr.mxu0 0.0
    %479 = vmatpush1.msra.mxu0 0.0
    %480 = vmatprep.subr.mxu0 0.0
    %481 = vmatpush1.msra.mxu0 0.0
    %482 = vmatprep.subr.mxu0 0.0
    %483 = vmatpush1.msra.mxu0 0.0
    %484 = vmatprep.subr.mxu0 0.0
    %485 = vmatpush1.msra.mxu0 0.0
    %486 = vmatprep.subr.mxu0 0.0
    %487 = vmatpush1.msra.mxu0 0.0
    %488 = vmatprep.subr.mxu0 0.0
    %489 = vmatpush1.msra.mxu0 0.0
    %490 = vmatprep.subr.mxu0 0.0
    %491 = vmatpush1.msra.mxu0 0.0
    %492 = vmatprep.subr.mxu0 0.0
    %493 = vmatpush1.msra.mxu0 0.0
    %494 = vmatprep.subr.mxu0 0.0
    %495 = vmatpush1.msra.mxu0 0.0
    %496 = vmatprep.subr.mxu0 0.0
    %497 = vmatpush1.msra.mxu0 0.0
    %498 = vmatprep.subr.mxu0 0.0
    %499 = vmatpush1.msra.mxu0 0.0
    %500 = vmatprep.subr.mxu0 0.0
    %501 = vmatpush1.msra.mxu0 0.0
    %502 = vmatprep.subr.mxu0 0.0
    %503 = vmatpush1.msra.mxu0 0.0
    %504 = vmatprep.subr.mxu0 0.0
    %505 = vmatpush1.msra.mxu0 0.0
    %506 = vmatprep.subr.mxu0 0.0
    %507 = vmatpush1.msra.mxu0 0.0
    %508 = vmatprep.subr.mxu0 0.0
    %509 = vmatpush1.msra.mxu0 0.0
    %510 = vmatprep.mubr.f32.mxu0 0.0
    %511 = vmatmul.mubr.f32.gmra.mrb[0].mxu0 %v227
    %v512 = vpop.f32.mrb[0].mxu0
    %v513 = vadd.f32 0.0, %v512
    %v514 = vpop.f32.mrb[0].mxu0
    %v515 = vadd.f32 0.0, %v514
    %516 = vdwg.mxu0
    %v517 = vmul.f32 %v296, 0.125
    %v518 = vmul.f32 %v298, 0.125
    %v519 = vmul.f32 %v367, 0.125
    %v520 = vmul.f32 %v369, 0.125
    %v521 = vmul.f32 %v442, 0.125
    %v522 = vmul.f32 %v444, 0.125
    %v523 = vmul.f32 %v513, 0.125
    %v524 = vmul.f32 %v515, 0.125
    %v525 = vmul.f32 %v517, %v517
    %v526 = vmul.f32 %v518, %v518
    %v527 = vmul.f32 %v519, %v519
    %v528 = vmul.f32 %v520, %v520
    %v529 = vsub.f32 %v521, %v525
    %v530 = vsub.f32 %v522, %v526
    %v531 = vsub.f32 %v523, %v527
    %v532 = vsub.f32 %v524, %v528
    %v533 = vmax.f32 %v529, 0.0
    %v534 = vmax.f32 %v530, 0.0
    %v535 = vmax.f32 %v531, 0.0
    %v536 = vmax.f32 %v532, 0.0
    %v537 = vadd.f32 %v533, 1e-05
    %v538 = vadd.f32 %v534, 1e-05
    %v539 = vadd.f32 %v535, 1e-05
    %v540 = vadd.f32 %v536, 1e-05
    %v541 = vrsqrt.pop %v537
    %v542 = vrsqrt.pop %v538
    %v543 = vrsqrt.pop %v539
    %v544 = vrsqrt.pop %v540
    %v549 = vcombine.low %v541, %v542
    %v550 = vcombine.low %v543, %v544
    %v552 = vunpack.c.l.s4 1966171168
    %v553 = vunpack.c.0.s8 %v552
    %v554 = vlaneseq
    %v555 = vshrl.u32 %v554, 7
    %v556 = vsub.s32 %v553, %v555
    %v557 = vrot.slane %v549, %v556
    %v559 = vunpack.c.l.s4 1966171168
    %v560 = vunpack.c.0.s8 %v559
    %v561 = vlaneseq
    %v562 = vshrl.u32 %v561, 7
    %v563 = vsub.s32 %v560, %v562
    %v564 = vrot.slane %v550, %v563
    %v565 = vcombine.low %v557, %v564
    %v567 = vunpack.c.l.s4 1966171168
    %v568 = vunpack.c.0.s8 %v567
    %v569 = vlaneseq
    %v570 = vshrl.u32 %v569, 7
    %v571 = vsub.s32 %v568, %v570
    %v572 = vrot.slane %v565, %v571
    %v574 = vmul.f32 %v223, %v572
    %v576 = vlaneseq
    %v577 = vshrl.u32 %v576, 7
    %v578 = vsub.s32 0, %v577
    %v579 = vrot.slane %v574, %v578
    %v580 = vlaneseq
    %v581 = vshrl.u32 %v580, 7
    %v582 = vsub.s32 1, %v581
    %v583 = vrot.slane %v574, %v582
    %v584 = vlaneseq
    %v585 = vshrl.u32 %v584, 7
    %v586 = vsub.s32 2, %v585
    %v587 = vrot.slane %v574, %v586
    %v588 = vlaneseq
    %v589 = vshrl.u32 %v588, 7
    %v590 = vsub.s32 3, %v589
    %v591 = vrot.slane %v574, %v590
    %v596 = vmul.f32 %v517, %v579
    %v597 = vmul.f32 %v518, %v583
    %v598 = vmul.f32 %v519, %v587
    %v599 = vmul.f32 %v520, %v591
    %v604 = vcombine.low %v596, %v597
    %v605 = vcombine.low %v598, %v599
    %v607 = vunpack.c.l.s4 1966171168
    %v608 = vunpack.c.0.s8 %v607
    %v609 = vlaneseq
    %v610 = vshrl.u32 %v609, 7
    %v611 = vsub.s32 %v608, %v610
    %v612 = vrot.slane %v604, %v611
    %v614 = vunpack.c.l.s4 1966171168
    %v615 = vunpack.c.0.s8 %v614
    %v616 = vlaneseq
    %v617 = vshrl.u32 %v616, 7
    %v618 = vsub.s32 %v615, %v617
    %v619 = vrot.slane %v605, %v618
    %v620 = vcombine.low %v612, %v619
    %v622 = vunpack.c.l.s4 1966171168
    %v623 = vunpack.c.0.s8 %v622
    %v624 = vlaneseq
    %v625 = vshrl.u32 %v624, 7
    %v626 = vsub.s32 %v623, %v625
    %v627 = vrot.slane %v620, %v626
    %v629 = vsub.f32 %v224, %v627
    %v630 = vmul.f32 %v176, %v579
    %v631 = vmul.f32 %v178, %v583
    %v632 = vmul.f32 %v217, %v587
    %v633 = vmul.f32 %v219, %v591
    %v635 = vlaneseq
    %v636 = vshrl.u32 %v635, 7
    %v637 = vsub.s32 0, %v636
    %v638 = vrot.slane %v629, %v637
    %v639 = vlaneseq
    %v640 = vshrl.u32 %v639, 7
    %v641 = vsub.s32 1, %v640
    %v642 = vrot.slane %v629, %v641
    %v643 = vlaneseq
    %v644 = vshrl.u32 %v643, 7
    %v645 = vsub.s32 2, %v644
    %v646 = vrot.slane %v629, %v645
    %v647 = vlaneseq
    %v648 = vshrl.u32 %v647, 7
    %v649 = vsub.s32 3, %v648
    %v650 = vrot.slane %v629, %v649
    %v655 = vadd.f32 %v630, %v638
    %v656 = vadd.f32 %v631, %v642
    %v657 = vadd.f32 %v632, %v646
    %v658 = vadd.f32 %v633, %v650
    %v659 = vmax.f32 %v655, 0.0
    %v660 = vmax.f32 %v656, 0.0
    %v661 = vmax.f32 %v657, 0.0
    %v662 = vmax.f32 %v658, 0.0
    %v663 = vpack.c.bf16 %v659, %v659
    %v664 = vpack.c.bf16 %v660, %v660
    %v665 = vpack.c.bf16 %v661, %v661
    %v666 = vpack.c.bf16 %v662, %v662
    %v667 = vld [vmem:[#allocation7] sm:$0xff]
    %v668 = vld [vmem:[#allocation7 + $0x8] sm:$0xff]
    %v669 = vld [vmem:[#allocation7 + $0x10] sm:$0xff]
    %v670 = vld [vmem:[#allocation7 + $0x18] sm:$0xff]
    %v671 = vld [vmem:[#allocation7 + $0x20] sm:$0xff]
    %v672 = vld [vmem:[#allocation7 + $0x28] sm:$0xff]
    %v673 = vld [vmem:[#allocation7 + $0x30] sm:$0xff]
    %v674 = vld [vmem:[#allocation7 + $0x38] sm:$0xff]
    %v675 = vld [vmem:[#allocation7 + $0x40] sm:$0xff]
    %v676 = vld [vmem:[#allocation7 + $0x48] sm:$0xff]
    %v677 = vld [vmem:[#allocation7 + $0x50] sm:$0xff]
    %v678 = vld [vmem:[#allocation7 + $0x58] sm:$0xff]
    %v679 = vld [vmem:[#allocation7 + $0x60] sm:$0xff]
    %v680 = vld [vmem:[#allocation7 + $0x68] sm:$0xff]
    %v681 = vld [vmem:[#allocation7 + $0x70] sm:$0xff]
    %v682 = vld [vmem:[#allocation7 + $0x78] sm:$0xff]
    %v683 = vld [vmem:[#allocation7 + $0x80] sm:$0xff]
    %v684 = vld [vmem:[#allocation7 + $0x88] sm:$0xff]
    %v685 = vld [vmem:[#allocation7 + $0x90] sm:$0xff]
    %v686 = vld [vmem:[#allocation7 + $0x98] sm:$0xff]
    %v687 = vld [vmem:[#allocation7 + $0xa0] sm:$0xff]
    %v688 = vld [vmem:[#allocation7 + $0xa8] sm:$0xff]
    %v689 = vld [vmem:[#allocation7 + $0xb0] sm:$0xff]
    %v690 = vld [vmem:[#allocation7 + $0xb8] sm:$0xff]
    %v691 = vld [vmem:[#allocation7 + $0xc0] sm:$0xff]
    %v692 = vld [vmem:[#allocation7 + $0xc8] sm:$0xff]
    %v693 = vld [vmem:[#allocation7 + $0xd0] sm:$0xff]
    %v694 = vld [vmem:[#allocation7 + $0xd8] sm:$0xff]
    %v695 = vld [vmem:[#allocation7 + $0xe0] sm:$0xff]
    %v696 = vld [vmem:[#allocation7 + $0xe8] sm:$0xff]
    %v697 = vld [vmem:[#allocation7 + $0xf0] sm:$0xff]
    %v698 = vld [vmem:[#allocation7 + $0xf8] sm:$0xff]
    %v699 = vld [vmem:[#allocation7 + $0x100] sm:$0xff]
    %v700 = vld [vmem:[#allocation7 + $0x108] sm:$0xff]
    %v701 = vld [vmem:[#allocation7 + $0x110] sm:$0xff]
    %v702 = vld [vmem:[#allocation7 + $0x118] sm:$0xff]
    %v703 = vld [vmem:[#allocation7 + $0x120] sm:$0xff]
    %v704 = vld [vmem:[#allocation7 + $0x128] sm:$0xff]
    %v705 = vld [vmem:[#allocation7 + $0x130] sm:$0xff]
    %v706 = vld [vmem:[#allocation7 + $0x138] sm:$0xff]
    %v707 = vld [vmem:[#allocation7 + $0x140] sm:$0xff]
    %v708 = vld [vmem:[#allocation7 + $0x148] sm:$0xff]
    %v709 = vld [vmem:[#allocation7 + $0x150] sm:$0xff]
    %v710 = vld [vmem:[#allocation7 + $0x158] sm:$0xff]
    %v711 = vld [vmem:[#allocation7 + $0x160] sm:$0xff]
    %v712 = vld [vmem:[#allocation7 + $0x168] sm:$0xff]
    %v713 = vld [vmem:[#allocation7 + $0x170] sm:$0xff]
    %v714 = vld [vmem:[#allocation7 + $0x178] sm:$0xff]
    %v715 = vld [vmem:[#allocation7 + $0x180] sm:$0xff]
    %v716 = vld [vmem:[#allocation7 + $0x188] sm:$0xff]
    %v717 = vld [vmem:[#allocation7 + $0x190] sm:$0xff]
    %v718 = vld [vmem:[#allocation7 + $0x198] sm:$0xff]
    %v719 = vld [vmem:[#allocation7 + $0x1a0] sm:$0xff]
    %v720 = vld [vmem:[#allocation7 + $0x1a8] sm:$0xff]
    %v721 = vld [vmem:[#allocation7 + $0x1b0] sm:$0xff]
    %v722 = vld [vmem:[#allocation7 + $0x1b8] sm:$0xff]
    %v723 = vld [vmem:[#allocation7 + $0x1c0] sm:$0xff]
    %v724 = vld [vmem:[#allocation7 + $0x1c8] sm:$0xff]
    %v725 = vld [vmem:[#allocation7 + $0x1d0] sm:$0xff]
    %v726 = vld [vmem:[#allocation7 + $0x1d8] sm:$0xff]
    %v727 = vld [vmem:[#allocation7 + $0x1e0] sm:$0xff]
    %v728 = vld [vmem:[#allocation7 + $0x1e8] sm:$0xff]
    %v729 = vld [vmem:[#allocation7 + $0x1f0] sm:$0xff]
    %v730 = vld [vmem:[#allocation7 + $0x1f8] sm:$0xff]
    %v795 = vunpack.c.l.b16 %v667
    %v796 = vunpack.c.h.b16 %v667
    %v797 = vunpack.c.l.b16 %v668
    %v798 = vunpack.c.h.b16 %v668
    %v799 = vunpack.c.l.b16 %v669
    %v800 = vunpack.c.h.b16 %v669
    %v801 = vunpack.c.l.b16 %v670
    %v802 = vunpack.c.h.b16 %v670
    %v803 = vunpack.c.l.b16 %v671
    %v804 = vunpack.c.h.b16 %v671
    %v805 = vunpack.c.l.b16 %v672
    %v806 = vunpack.c.h.b16 %v672
    %v807 = vunpack.c.l.b16 %v673
    %v808 = vunpack.c.h.b16 %v673
    %v809 = vunpack.c.l.b16 %v674
    %v810 = vunpack.c.h.b16 %v674
    %v811 = vunpack.c.l.b16 %v675
    %v812 = vunpack.c.h.b16 %v675
    %v813 = vunpack.c.l.b16 %v676
    %v814 = vunpack.c.h.b16 %v676
    %v815 = vunpack.c.l.b16 %v677
    %v816 = vunpack.c.h.b16 %v677
    %v817 = vunpack.c.l.b16 %v678
    %v818 = vunpack.c.h.b16 %v678
    %v819 = vunpack.c.l.b16 %v679
    %v820 = vunpack.c.h.b16 %v679
    %v821 = vunpack.c.l.b16 %v680
    %v822 = vunpack.c.h.b16 %v680
    %v823 = vunpack.c.l.b16 %v681
    %v824 = vunpack.c.h.b16 %v681
    %v825 = vunpack.c.l.b16 %v682
    %v826 = vunpack.c.h.b16 %v682
    %v827 = vunpack.c.l.b16 %v683
    %v828 = vunpack.c.h.b16 %v683
    %v829 = vunpack.c.l.b16 %v684
    %v830 = vunpack.c.h.b16 %v684
    %v831 = vunpack.c.l.b16 %v685
    %v832 = vunpack.c.h.b16 %v685
    %v833 = vunpack.c.l.b16 %v686
    %v834 = vunpack.c.h.b16 %v686
    %v835 = vunpack.c.l.b16 %v687
    %v836 = vunpack.c.h.b16 %v687
    %v837 = vunpack.c.l.b16 %v688
    %v838 = vunpack.c.h.b16 %v688
    %v839 = vunpack.c.l.b16 %v689
    %v840 = vunpack.c.h.b16 %v689
    %v841 = vunpack.c.l.b16 %v690
    %v842 = vunpack.c.h.b16 %v690
    %v843 = vunpack.c.l.b16 %v691
    %v844 = vunpack.c.h.b16 %v691
    %v845 = vunpack.c.l.b16 %v692
    %v846 = vunpack.c.h.b16 %v692
    %v847 = vunpack.c.l.b16 %v693
    %v848 = vunpack.c.h.b16 %v693
    %v849 = vunpack.c.l.b16 %v694
    %v850 = vunpack.c.h.b16 %v694
    %v851 = vunpack.c.l.b16 %v695
    %v852 = vunpack.c.h.b16 %v695
    %v853 = vunpack.c.l.b16 %v696
    %v854 = vunpack.c.h.b16 %v696
    %v855 = vunpack.c.l.b16 %v697
    %v856 = vunpack.c.h.b16 %v697
    %v857 = vunpack.c.l.b16 %v698
    %v858 = vunpack.c.h.b16 %v698
    %v859 = vunpack.c.l.b16 %v699
    %v860 = vunpack.c.h.b16 %v699
    %v861 = vunpack.c.l.b16 %v700
    %v862 = vunpack.c.h.b16 %v700
    %v863 = vunpack.c.l.b16 %v701
    %v864 = vunpack.c.h.b16 %v701
    %v865 = vunpack.c.l.b16 %v702
    %v866 = vunpack.c.h.b16 %v702
    %v867 = vunpack.c.l.b16 %v703
    %v868 = vunpack.c.h.b16 %v703
    %v869 = vunpack.c.l.b16 %v704
    %v870 = vunpack.c.h.b16 %v704
    %v871 = vunpack.c.l.b16 %v705
    %v872 = vunpack.c.h.b16 %v705
    %v873 = vunpack.c.l.b16 %v706
    %v874 = vunpack.c.h.b16 %v706
    %v875 = vunpack.c.l.b16 %v707
    %v876 = vunpack.c.h.b16 %v707
    %v877 = vunpack.c.l.b16 %v708
    %v878 = vunpack.c.h.b16 %v708
    %v879 = vunpack.c.l.b16 %v709
    %v880 = vunpack.c.h.b16 %v709
    %v881 = vunpack.c.l.b16 %v710
    %v882 = vunpack.c.h.b16 %v710
    %v883 = vunpack.c.l.b16 %v711
    %v884 = vunpack.c.h.b16 %v711
    %v885 = vunpack.c.l.b16 %v712
    %v886 = vunpack.c.h.b16 %v712
    %v887 = vunpack.c.l.b16 %v713
    %v888 = vunpack.c.h.b16 %v713
    %v889 = vunpack.c.l.b16 %v714
    %v890 = vunpack.c.h.b16 %v714
    %v891 = vunpack.c.l.b16 %v715
    %v892 = vunpack.c.h.b16 %v715
    %v893 = vunpack.c.l.b16 %v716
    %v894 = vunpack.c.h.b16 %v716
    %v895 = vunpack.c.l.b16 %v717
    %v896 = vunpack.c.h.b16 %v717
    %v897 = vunpack.c.l.b16 %v718
    %v898 = vunpack.c.h.b16 %v718
    %v899 = vunpack.c.l.b16 %v719
    %v900 = vunpack.c.h.b16 %v719
    %v901 = vunpack.c.l.b16 %v720
    %v902 = vunpack.c.h.b16 %v720
    %v903 = vunpack.c.l.b16 %v721
    %v904 = vunpack.c.h.b16 %v721
    %v905 = vunpack.c.l.b16 %v722
    %v906 = vunpack.c.h.b16 %v722
    %v907 = vunpack.c.l.b16 %v723
    %v908 = vunpack.c.h.b16 %v723
    %v909 = vunpack.c.l.b16 %v724
    %v910 = vunpack.c.h.b16 %v724
    %v911 = vunpack.c.l.b16 %v725
    %v912 = vunpack.c.h.b16 %v725
    %v913 = vunpack.c.l.b16 %v726
    %v914 = vunpack.c.h.b16 %v726
    %v915 = vunpack.c.l.b16 %v727
    %v916 = vunpack.c.h.b16 %v727
    %v917 = vunpack.c.l.b16 %v728
    %v918 = vunpack.c.h.b16 %v728
    %v919 = vunpack.c.l.b16 %v729
    %v920 = vunpack.c.h.b16 %v729
    %v921 = vunpack.c.l.b16 %v730
    %v922 = vunpack.c.h.b16 %v730
    %v923 = vpack.c.b16 %v797, %v795
    %v924 = vpack.c.b16 %v798, %v796
    %v925 = vpack.c.b16 %v801, %v799
    %v926 = vpack.c.b16 %v802, %v800
    %v927 = vpack.c.b16 %v805, %v803
    %v928 = vpack.c.b16 %v806, %v804
    %v929 = vpack.c.b16 %v809, %v807
    %v930 = vpack.c.b16 %v810, %v808
    %v931 = vpack.c.b16 %v813, %v811
    %v932 = vpack.c.b16 %v814, %v812
    %v933 = vpack.c.b16 %v817, %v815
    %v934 = vpack.c.b16 %v818, %v816
    %v935 = vpack.c.b16 %v821, %v819
    %v936 = vpack.c.b16 %v822, %v820
    %v937 = vpack.c.b16 %v825, %v823
    %v938 = vpack.c.b16 %v826, %v824
    %v939 = vpack.c.b16 %v829, %v827
    %v940 = vpack.c.b16 %v830, %v828
    %v941 = vpack.c.b16 %v833, %v831
    %v942 = vpack.c.b16 %v834, %v832
    %v943 = vpack.c.b16 %v837, %v835
    %v944 = vpack.c.b16 %v838, %v836
    %v945 = vpack.c.b16 %v841, %v839
    %v946 = vpack.c.b16 %v842, %v840
    %v947 = vpack.c.b16 %v845, %v843
    %v948 = vpack.c.b16 %v846, %v844
    %v949 = vpack.c.b16 %v849, %v847
    %v950 = vpack.c.b16 %v850, %v848
    %v951 = vpack.c.b16 %v853, %v851
    %v952 = vpack.c.b16 %v854, %v852
    %v953 = vpack.c.b16 %v857, %v855
    %v954 = vpack.c.b16 %v858, %v856
    %v955 = vpack.c.b16 %v861, %v859
    %v956 = vpack.c.b16 %v862, %v860
    %v957 = vpack.c.b16 %v865, %v863
    %v958 = vpack.c.b16 %v866, %v864
    %v959 = vpack.c.b16 %v869, %v867
    %v960 = vpack.c.b16 %v870, %v868
    %v961 = vpack.c.b16 %v873, %v871
    %v962 = vpack.c.b16 %v874, %v872
    %v963 = vpack.c.b16 %v877, %v875
    %v964 = vpack.c.b16 %v878, %v876
    %v965 = vpack.c.b16 %v881, %v879
    %v966 = vpack.c.b16 %v882, %v880
    %v967 = vpack.c.b16 %v885, %v883
    %v968 = vpack.c.b16 %v886, %v884
    %v969 = vpack.c.b16 %v889, %v887
    %v970 = vpack.c.b16 %v890, %v888
    %v971 = vpack.c.b16 %v893, %v891
    %v972 = vpack.c.b16 %v894, %v892
    %v973 = vpack.c.b16 %v897, %v895
    %v974 = vpack.c.b16 %v898, %v896
    %v975 = vpack.c.b16 %v901, %v899
    %v976 = vpack.c.b16 %v902, %v900
    %v977 = vpack.c.b16 %v905, %v903
    %v978 = vpack.c.b16 %v906, %v904
    %v979 = vpack.c.b16 %v909, %v907
    %v980 = vpack.c.b16 %v910, %v908
    %v981 = vpack.c.b16 %v913, %v911
    %v982 = vpack.c.b16 %v914, %v912
    %v983 = vpack.c.b16 %v917, %v915
    %v984 = vpack.c.b16 %v918, %v916
    %v985 = vpack.c.b16 %v921, %v919
    %v986 = vpack.c.b16 %v922, %v920
    %1051 = vmatprep.subr.bf16.mxu0 %v924
    %1052 = vmatpush1.bf16.msra.mxu0 %v923
    %1053 = vmatprep.subr.bf16.mxu0 %v926
    %1054 = vmatpush1.bf16.msra.mxu0 %v925
    %1055 = vmatprep.subr.bf16.mxu0 %v928
    %1056 = vmatpush1.bf16.msra.mxu0 %v927
    %1057 = vmatprep.subr.bf16.mxu0 %v930
    %1058 = vmatpush1.bf16.msra.mxu0 %v929
    %1059 = vmatprep.subr.bf16.mxu0 %v932
    %1060 = vmatpush1.bf16.msra.mxu0 %v931
    %1061 = vmatprep.subr.bf16.mxu0 %v934
    %1062 = vmatpush1.bf16.msra.mxu0 %v933
    %1063 = vmatprep.subr.bf16.mxu0 %v936
    %1064 = vmatpush1.bf16.msra.mxu0 %v935
    %1065 = vmatprep.subr.bf16.mxu0 %v938
    %1066 = vmatpush1.bf16.msra.mxu0 %v937
    %1067 = vmatprep.subr.bf16.mxu0 %v940
    %1068 = vmatpush1.bf16.msra.mxu0 %v939
    %1069 = vmatprep.subr.bf16.mxu0 %v942
    %1070 = vmatpush1.bf16.msra.mxu0 %v941
    %1071 = vmatprep.subr.bf16.mxu0 %v944
    %1072 = vmatpush1.bf16.msra.mxu0 %v943
    %1073 = vmatprep.subr.bf16.mxu0 %v946
    %1074 = vmatpush1.bf16.msra.mxu0 %v945
    %1075 = vmatprep.subr.bf16.mxu0 %v948
    %1076 = vmatpush1.bf16.msra.mxu0 %v947
    %1077 = vmatprep.subr.bf16.mxu0 %v950
    %1078 = vmatpush1.bf16.msra.mxu0 %v949
    %1079 = vmatprep.subr.bf16.mxu0 %v952
    %1080 = vmatpush1.bf16.msra.mxu0 %v951
    %1081 = vmatprep.subr.bf16.mxu0 %v954
    %1082 = vmatpush1.bf16.msra.mxu0 %v953
    %1083 = vmatprep.mubr.bf16.mxu0 %v664
    %1084 = vmatmul.mubr.bf16.gmra.mrb[0].mxu0 %v663
    %v1085 = vpop.f32.mrb[0].mxu0
    %v1086 = vadd.f32 0.0, %v1085
    %v1087 = vpop.f32.mrb[0].mxu0
    %v1088 = vadd.f32 0.0, %v1087
    %v1089 = vpop.f32.mrb[0].mxu0
    %v1090 = vpop.f32.mrb[0].mxu0
    %1091 = vdwg.mxu0
    %1092 = vmatprep.subr.bf16.mxu0 %v956
    %1093 = vmatpush1.bf16.msra.mxu0 %v955
    %1094 = vmatprep.subr.bf16.mxu0 %v958
    %1095 = vmatpush1.bf16.msra.mxu0 %v957
    %1096 = vmatprep.subr.bf16.mxu0 %v960
    %1097 = vmatpush1.bf16.msra.mxu0 %v959
    %1098 = vmatprep.subr.bf16.mxu0 %v962
    %1099 = vmatpush1.bf16.msra.mxu0 %v961
    %1100 = vmatprep.subr.bf16.mxu0 %v964
    %1101 = vmatpush1.bf16.msra.mxu0 %v963
    %1102 = vmatprep.subr.bf16.mxu0 %v966
    %1103 = vmatpush1.bf16.msra.mxu0 %v965
    %1104 = vmatprep.subr.bf16.mxu0 %v968
    %1105 = vmatpush1.bf16.msra.mxu0 %v967
    %1106 = vmatprep.subr.bf16.mxu0 %v970
    %1107 = vmatpush1.bf16.msra.mxu0 %v969
    %1108 = vmatprep.subr.bf16.mxu0 %v972
    %1109 = vmatpush1.bf16.msra.mxu0 %v971
    %1110 = vmatprep.subr.bf16.mxu0 %v974
    %1111 = vmatpush1.bf16.msra.mxu0 %v973
    %1112 = vmatprep.subr.bf16.mxu0 %v976
    %1113 = vmatpush1.bf16.msra.mxu0 %v975
    %1114 = vmatprep.subr.bf16.mxu0 %v978
    %1115 = vmatpush1.bf16.msra.mxu0 %v977
    %1116 = vmatprep.subr.bf16.mxu0 %v980
    %1117 = vmatpush1.bf16.msra.mxu0 %v979
    %1118 = vmatprep.subr.bf16.mxu0 %v982
    %1119 = vmatpush1.bf16.msra.mxu0 %v981
    %1120 = vmatprep.subr.bf16.mxu0 %v984
    %1121 = vmatpush1.bf16.msra.mxu0 %v983
    %1122 = vmatprep.subr.bf16.mxu0 %v986
    %1123 = vmatpush1.bf16.msra.mxu0 %v985
    %1124 = vmatprep.mubr.bf16.mxu0 %v666
    %1125 = vmatmul.mubr.bf16.gmra.mrb[0].mxu0 %v665
    %v1126 = vpop.f32.mrb[0].mxu0
    %v1127 = vadd.f32 %v1086, %v1126
    %v1128 = vpop.f32.mrb[0].mxu0
    %v1129 = vadd.f32 %v1088, %v1128
    %v1130 = vpop.f32.mrb[0].mxu0
    %v1131 = vpop.f32.mrb[0].mxu0
    %1132 = vdwg.mxu0
    %v1133 = vld [vmem:[%s5] sm:$0x3]
    %v1134 = vld [vmem:[%s6] sm:$0x3]
    %1135 = vmatprep.subr.mxu0 %v1129
    %1136 = vmatpush1.msra.mxu0 %v1127
    %1137 = vmatprep.subr.mxu0 0.0
    %1138 = vmatpush1.msra.mxu0 0.0
    %1139 = vmatprep.subr.mxu0 0.0
    %1140 = vmatpush1.msra.mxu0 0.0
    %1141 = vmatprep.subr.mxu0 0.0
    %1142 = vmatpush1.msra.mxu0 0.0
    %1143 = vmatprep.subr.mxu0 0.0
    %1144 = vmatpush1.msra.mxu0 0.0
    %1145 = vmatprep.subr.mxu0 0.0
    %1146 = vmatpush1.msra.mxu0 0.0
    %1147 = vmatprep.subr.mxu0 0.0
    %1148 = vmatpush1.msra.mxu0 0.0
    %1149 = vmatprep.subr.mxu0 0.0
    %1150 = vmatpush1.msra.mxu0 0.0
    %1151 = vmatprep.subr.mxu0 0.0
    %1152 = vmatpush1.msra.mxu0 0.0
    %1153 = vmatprep.subr.mxu0 0.0
    %1154 = vmatpush1.msra.mxu0 0.0
    %1155 = vmatprep.subr.mxu0 0.0
    %1156 = vmatpush1.msra.mxu0 0.0
    %1157 = vmatprep.subr.mxu0 0.0
    %1158 = vmatpush1.msra.mxu0 0.0
    %1159 = vmatprep.subr.mxu0 0.0
    %1160 = vmatpush1.msra.mxu0 0.0
    %1161 = vmatprep.subr.mxu0 0.0
    %1162 = vmatpush1.msra.mxu0 0.0
    %1163 = vmatprep.subr.mxu0 0.0
    %1164 = vmatpush1.msra.mxu0 0.0
    %1165 = vmatprep.subr.mxu0 0.0
    %1166 = vmatpush1.msra.mxu0 0.0
    %1167 = vmatprep.subr.mxu0 0.0
    %1168 = vmatpush1.msra.mxu0 0.0
    %1169 = vmatprep.subr.mxu0 0.0
    %1170 = vmatpush1.msra.mxu0 0.0
    %1171 = vmatprep.subr.mxu0 0.0
    %1172 = vmatpush1.msra.mxu0 0.0
    %1173 = vmatprep.subr.mxu0 0.0
    %1174 = vmatpush1.msra.mxu0 0.0
    %1175 = vmatprep.subr.mxu0 0.0
    %1176 = vmatpush1.msra.mxu0 0.0
    %1177 = vmatprep.subr.mxu0 0.0
    %1178 = vmatpush1.msra.mxu0 0.0
    %1179 = vmatprep.subr.mxu0 0.0
    %1180 = vmatpush1.msra.mxu0 0.0
    %1181 = vmatprep.subr.mxu0 0.0
    %1182 = vmatpush1.msra.mxu0 0.0
    %1183 = vmatprep.subr.mxu0 0.0
    %1184 = vmatpush1.msra.mxu0 0.0
    %1185 = vmatprep.subr.mxu0 0.0
    %1186 = vmatpush1.msra.mxu0 0.0
    %1187 = vmatprep.subr.mxu0 0.0
    %1188 = vmatpush1.msra.mxu0 0.0
    %1189 = vmatprep.subr.mxu0 0.0
    %1190 = vmatpush1.msra.mxu0 0.0
    %1191 = vmatprep.subr.mxu0 0.0
    %1192 = vmatpush1.msra.mxu0 0.0
    %1193 = vmatprep.subr.mxu0 0.0
    %1194 = vmatpush1.msra.mxu0 0.0
    %1195 = vmatprep.subr.mxu0 0.0
    %1196 = vmatpush1.msra.mxu0 0.0
    %1197 = vmatprep.subr.mxu0 0.0
    %1198 = vmatpush1.msra.mxu0 0.0
    %1199 = vmatprep.mubr.f32.mxu0 0.0
    %1200 = vmatmul.mubr.f32.gmra.mrb[0].mxu0 %v227
    %v1201 = vpop.f32.mrb[0].mxu0
    %v1202 = vadd.f32 0.0, %v1201
    %v1203 = vpop.f32.mrb[0].mxu0
    %v1204 = vadd.f32 0.0, %v1203
    %1205 = vdwg.mxu0
    %v1206 = vmul.f32 %v1127, %v1127
    %v1207 = vmul.f32 %v1129, %v1129
    %1208 = vmatprep.subr.mxu0 %v1207
    %1209 = vmatpush1.msra.mxu0 %v1206
    %1210 = vmatprep.subr.mxu0 0.0
    %1211 = vmatpush1.msra.mxu0 0.0
    %1212 = vmatprep.subr.mxu0 0.0
    %1213 = vmatpush1.msra.mxu0 0.0
    %1214 = vmatprep.subr.mxu0 0.0
    %1215 = vmatpush1.msra.mxu0 0.0
    %1216 = vmatprep.subr.mxu0 0.0
    %1217 = vmatpush1.msra.mxu0 0.0
    %1218 = vmatprep.subr.mxu0 0.0
    %1219 = vmatpush1.msra.mxu0 0.0
    %1220 = vmatprep.subr.mxu0 0.0
    %1221 = vmatpush1.msra.mxu0 0.0
    %1222 = vmatprep.subr.mxu0 0.0
    %1223 = vmatpush1.msra.mxu0 0.0
    %1224 = vmatprep.subr.mxu0 0.0
    %1225 = vmatpush1.msra.mxu0 0.0
    %1226 = vmatprep.subr.mxu0 0.0
    %1227 = vmatpush1.msra.mxu0 0.0
    %1228 = vmatprep.subr.mxu0 0.0
    %1229 = vmatpush1.msra.mxu0 0.0
    %1230 = vmatprep.subr.mxu0 0.0
    %1231 = vmatpush1.msra.mxu0 0.0
    %1232 = vmatprep.subr.mxu0 0.0
    %1233 = vmatpush1.msra.mxu0 0.0
    %1234 = vmatprep.subr.mxu0 0.0
    %1235 = vmatpush1.msra.mxu0 0.0
    %1236 = vmatprep.subr.mxu0 0.0
    %1237 = vmatpush1.msra.mxu0 0.0
    %1238 = vmatprep.subr.mxu0 0.0
    %1239 = vmatpush1.msra.mxu0 0.0
    %1240 = vmatprep.subr.mxu0 0.0
    %1241 = vmatpush1.msra.mxu0 0.0
    %1242 = vmatprep.subr.mxu0 0.0
    %1243 = vmatpush1.msra.mxu0 0.0
    %1244 = vmatprep.subr.mxu0 0.0
    %1245 = vmatpush1.msra.mxu0 0.0
    %1246 = vmatprep.subr.mxu0 0.0
    %1247 = vmatpush1.msra.mxu0 0.0
    %1248 = vmatprep.subr.mxu0 0.0
    %1249 = vmatpush1.msra.mxu0 0.0
    %1250 = vmatprep.subr.mxu0 0.0
    %1251 = vmatpush1.msra.mxu0 0.0
    %1252 = vmatprep.subr.mxu0 0.0
    %1253 = vmatpush1.msra.mxu0 0.0
    %1254 = vmatprep.subr.mxu0 0.0
    %1255 = vmatpush1.msra.mxu0 0.0
    %1256 = vmatprep.subr.mxu0 0.0
    %1257 = vmatpush1.msra.mxu0 0.0
    %1258 = vmatprep.subr.mxu0 0.0
    %1259 = vmatpush1.msra.mxu0 0.0
    %1260 = vmatprep.subr.mxu0 0.0
    %1261 = vmatpush1.msra.mxu0 0.0
    %1262 = vmatprep.subr.mxu0 0.0
    %1263 = vmatpush1.msra.mxu0 0.0
    %1264 = vmatprep.subr.mxu0 0.0
    %1265 = vmatpush1.msra.mxu0 0.0
    %1266 = vmatprep.subr.mxu0 0.0
    %1267 = vmatpush1.msra.mxu0 0.0
    %1268 = vmatprep.subr.mxu0 0.0
    %1269 = vmatpush1.msra.mxu0 0.0
    %1270 = vmatprep.subr.mxu0 0.0
    %1271 = vmatpush1.msra.mxu0 0.0
    %1272 = vmatprep.mubr.f32.mxu0 0.0
    %1273 = vmatmul.mubr.f32.gmra.mrb[0].mxu0 %v227
    %v1274 = vpop.f32.mrb[0].mxu0
    %v1275 = vadd.f32 0.0, %v1274
    %v1276 = vpop.f32.mrb[0].mxu0
    %v1277 = vadd.f32 0.0, %v1276
    %1278 = vdwg.mxu0
    %v1279 = vmul.f32 %v1202, 0.125
    %v1280 = vmul.f32 %v1204, 0.125
    %v1281 = vmul.f32 %v1275, 0.125
    %v1282 = vmul.f32 %v1277, 0.125
    %v1283 = vmul.f32 %v1279, %v1279
    %v1284 = vmul.f32 %v1280, %v1280
    %v1285 = vsub.f32 %v1281, %v1283
    %v1286 = vsub.f32 %v1282, %v1284
    %v1287 = vmax.f32 %v1285, 0.0
    %v1288 = vmax.f32 %v1286, 0.0
    %v1289 = vadd.f32 %v1287, 1e-05
    %v1290 = vadd.f32 %v1288, 1e-05
    %v1291 = vrsqrt.pop %v1289
    %v1292 = vrsqrt.pop %v1290
    %v1295 = vcombine.low %v1291, %v1292
    %v1297 = vunpack.c.l.s4 1966171168
    %v1298 = vunpack.c.0.s8 %v1297
    %v1299 = vlaneseq
    %v1300 = vshrl.u32 %v1299, 7
    %v1301 = vsub.s32 %v1298, %v1300
    %v1302 = vrot.slane %v1295, %v1301
    %v1304 = vunpack.c.l.s4 1966171168
    %v1305 = vunpack.c.0.s8 %v1304
    %v1306 = vlaneseq
    %v1307 = vshrl.u32 %v1306, 7
    %v1308 = vsub.s32 %v1305, %v1307
    %v1309 = vrot.slane %v1302, %v1308
    %v1311 = vmul.f32 %v1133, %v1309
    %v1313 = vlaneseq
    %v1314 = vshrl.u32 %v1313, 7
    %v1315 = vsub.s32 0, %v1314
    %v1316 = vrot.slane %v1311, %v1315
    %v1317 = vlaneseq
    %v1318 = vshrl.u32 %v1317, 7
    %v1319 = vsub.s32 1, %v1318
    %v1320 = vrot.slane %v1311, %v1319
    %v1323 = vmul.f32 %v1279, %v1316
    %v1324 = vmul.f32 %v1280, %v1320
    %v1327 = vcombine.low %v1323, %v1324
    %v1329 = vunpack.c.l.s4 1966171168
    %v1330 = vunpack.c.0.s8 %v1329
    %v1331 = vlaneseq
    %v1332 = vshrl.u32 %v1331, 7
    %v1333 = vsub.s32 %v1330, %v1332
    %v1334 = vrot.slane %v1327, %v1333
    %v1336 = vunpack.c.l.s4 1966171168
    %v1337 = vunpack.c.0.s8 %v1336
    %v1338 = vlaneseq
    %v1339 = vshrl.u32 %v1338, 7
    %v1340 = vsub.s32 %v1337, %v1339
    %v1341 = vrot.slane %v1334, %v1340
    %v1343 = vsub.f32 %v1134, %v1341
    %v1344 = vmul.f32 %v1127, %v1316
    %v1345 = vmul.f32 %v1129, %v1320
    %v1347 = vlaneseq
    %v1348 = vshrl.u32 %v1347, 7
    %v1349 = vsub.s32 0, %v1348
    %v1350 = vrot.slane %v1343, %v1349
    %v1351 = vlaneseq
    %v1352 = vshrl.u32 %v1351, 7
    %v1353 = vsub.s32 1, %v1352
    %v1354 = vrot.slane %v1343, %v1353
    %v1357 = vadd.f32 %v1344, %v1350
    %v1358 = vadd.f32 %v1345, %v1354
    %v1359 = vmax.f32 %v1357, 0.0
    %v1360 = vmax.f32 %v1358, 0.0
    %v1361 = vpack.c.bf16 %v1359, %v1359
    %v1362 = vpack.c.bf16 %v1360, %v1360
    %v1363 = vld [vmem:[#allocation8] sm:$0xf]
    %v1364 = vld [vmem:[#allocation8 + $0x4] sm:$0xf]
    %v1365 = vld [vmem:[#allocation8 + $0x8] sm:$0xf]
    %v1366 = vld [vmem:[#allocation8 + $0xc] sm:$0xf]
    %v1367 = vld [vmem:[#allocation8 + $0x10] sm:$0xf]
    %v1368 = vld [vmem:[#allocation8 + $0x14] sm:$0xf]
    %v1369 = vld [vmem:[#allocation8 + $0x18] sm:$0xf]
    %v1370 = vld [vmem:[#allocation8 + $0x1c] sm:$0xf]
    %v1371 = vld [vmem:[#allocation8 + $0x20] sm:$0xf]
    %v1372 = vld [vmem:[#allocation8 + $0x24] sm:$0xf]
    %v1373 = vld [vmem:[#allocation8 + $0x28] sm:$0xf]
    %v1374 = vld [vmem:[#allocation8 + $0x2c] sm:$0xf]
    %v1375 = vld [vmem:[#allocation8 + $0x30] sm:$0xf]
    %v1376 = vld [vmem:[#allocation8 + $0x34] sm:$0xf]
    %v1377 = vld [vmem:[#allocation8 + $0x38] sm:$0xf]
    %v1378 = vld [vmem:[#allocation8 + $0x3c] sm:$0xf]
    %v1379 = vld [vmem:[#allocation8 + $0x40] sm:$0xf]
    %v1380 = vld [vmem:[#allocation8 + $0x44] sm:$0xf]
    %v1381 = vld [vmem:[#allocation8 + $0x48] sm:$0xf]
    %v1382 = vld [vmem:[#allocation8 + $0x4c] sm:$0xf]
    %v1383 = vld [vmem:[#allocation8 + $0x50] sm:$0xf]
    %v1384 = vld [vmem:[#allocation8 + $0x54] sm:$0xf]
    %v1385 = vld [vmem:[#allocation8 + $0x58] sm:$0xf]
    %v1386 = vld [vmem:[#allocation8 + $0x5c] sm:$0xf]
    %v1387 = vld [vmem:[#allocation8 + $0x60] sm:$0xf]
    %v1388 = vld [vmem:[#allocation8 + $0x64] sm:$0xf]
    %v1389 = vld [vmem:[#allocation8 + $0x68] sm:$0xf]
    %v1390 = vld [vmem:[#allocation8 + $0x6c] sm:$0xf]
    %v1391 = vld [vmem:[#allocation8 + $0x70] sm:$0xf]
    %v1392 = vld [vmem:[#allocation8 + $0x74] sm:$0xf]
    %v1393 = vld [vmem:[#allocation8 + $0x78] sm:$0xf]
    %v1394 = vld [vmem:[#allocation8 + $0x7c] sm:$0xf]
    %v1395 = vld [vmem:[%s8] sm:$0x1]
    %v1397 = vlaneseq
    %v1398 = vshrl.u32 %v1397, 7
    %v1399 = vsub.s32 0, %v1398
    %v1400 = vrot.slane %v1395, %v1399
    %v1434 = vunpack.c.l.b16 %v1363
    %v1435 = vunpack.c.l.b16 %v1364
    %v1436 = vunpack.c.l.b16 %v1365
    %v1437 = vunpack.c.l.b16 %v1366
    %v1438 = vunpack.c.l.b16 %v1367
    %v1439 = vunpack.c.l.b16 %v1368
    %v1440 = vunpack.c.l.b16 %v1369
    %v1441 = vunpack.c.l.b16 %v1370
    %v1442 = vunpack.c.l.b16 %v1371
    %v1443 = vunpack.c.l.b16 %v1372
    %v1444 = vunpack.c.l.b16 %v1373
    %v1445 = vunpack.c.l.b16 %v1374
    %v1446 = vunpack.c.l.b16 %v1375
    %v1447 = vunpack.c.l.b16 %v1376
    %v1448 = vunpack.c.l.b16 %v1377
    %v1449 = vunpack.c.l.b16 %v1378
    %v1450 = vunpack.c.l.b16 %v1379
    %v1451 = vunpack.c.l.b16 %v1380
    %v1452 = vunpack.c.l.b16 %v1381
    %v1453 = vunpack.c.l.b16 %v1382
    %v1454 = vunpack.c.l.b16 %v1383
    %v1455 = vunpack.c.l.b16 %v1384
    %v1456 = vunpack.c.l.b16 %v1385
    %v1457 = vunpack.c.l.b16 %v1386
    %v1458 = vunpack.c.l.b16 %v1387
    %v1459 = vunpack.c.l.b16 %v1388
    %v1460 = vunpack.c.l.b16 %v1389
    %v1461 = vunpack.c.l.b16 %v1390
    %v1462 = vunpack.c.l.b16 %v1391
    %v1463 = vunpack.c.l.b16 %v1392
    %v1464 = vunpack.c.l.b16 %v1393
    %v1465 = vunpack.c.l.b16 %v1394
    %v1466 = vpack.c.b16 %v1435, %v1434
    %v1467 = vpack.c.b16 %v1437, %v1436
    %v1468 = vpack.c.b16 %v1439, %v1438
    %v1469 = vpack.c.b16 %v1441, %v1440
    %v1470 = vpack.c.b16 %v1443, %v1442
    %v1471 = vpack.c.b16 %v1445, %v1444
    %v1472 = vpack.c.b16 %v1447, %v1446
    %v1473 = vpack.c.b16 %v1449, %v1448
    %v1474 = vpack.c.b16 %v1451, %v1450
    %v1475 = vpack.c.b16 %v1453, %v1452
    %v1476 = vpack.c.b16 %v1455, %v1454
    %v1477 = vpack.c.b16 %v1457, %v1456
    %v1478 = vpack.c.b16 %v1459, %v1458
    %v1479 = vpack.c.b16 %v1461, %v1460
    %v1480 = vpack.c.b16 %v1463, %v1462
    %v1481 = vpack.c.b16 %v1465, %v1464
    %1498 = vmatprep.subr.bf16.mxu0 0
    %1499 = vmatpush1.bf16.msra.mxu0 %v1466
    %1500 = vmatprep.subr.bf16.mxu0 0
    %1501 = vmatpush1.bf16.msra.mxu0 %v1467
    %1502 = vmatprep.subr.bf16.mxu0 0
    %1503 = vmatpush1.bf16.msra.mxu0 %v1468
    %1504 = vmatprep.subr.bf16.mxu0 0
    %1505 = vmatpush1.bf16.msra.mxu0 %v1469
    %1506 = vmatprep.subr.bf16.mxu0 0
    %1507 = vmatpush1.bf16.msra.mxu0 %v1470
    %1508 = vmatprep.subr.bf16.mxu0 0
    %1509 = vmatpush1.bf16.msra.mxu0 %v1471
    %1510 = vmatprep.subr.bf16.mxu0 0
    %1511 = vmatpush1.bf16.msra.mxu0 %v1472
    %1512 = vmatprep.subr.bf16.mxu0 0
    %1513 = vmatpush1.bf16.msra.mxu0 %v1473
    %1514 = vmatprep.subr.bf16.mxu0 0
    %1515 = vmatpush1.bf16.msra.mxu0 %v1474
    %1516 = vmatprep.subr.bf16.mxu0 0
    %1517 = vmatpush1.bf16.msra.mxu0 %v1475
    %1518 = vmatprep.subr.bf16.mxu0 0
    %1519 = vmatpush1.bf16.msra.mxu0 %v1476
    %1520 = vmatprep.subr.bf16.mxu0 0
    %1521 = vmatpush1.bf16.msra.mxu0 %v1477
    %1522 = vmatprep.subr.bf16.mxu0 0
    %1523 = vmatpush1.bf16.msra.mxu0 %v1478
    %1524 = vmatprep.subr.bf16.mxu0 0
    %1525 = vmatpush1.bf16.msra.mxu0 %v1479
    %1526 = vmatprep.subr.bf16.mxu0 0
    %1527 = vmatpush1.bf16.msra.mxu0 %v1480
    %1528 = vmatprep.subr.bf16.mxu0 0
    %1529 = vmatpush1.bf16.msra.mxu0 %v1481
    %1530 = vmatprep.mubr.bf16.mxu0 %v1362
    %1531 = vmatmul.mubr.bf16.gmra.mrb[0].mxu0 %v1361
    %v1532 = vpop.f32.mrb[0].mxu0
    %v1533 = vadd.f32 %v1400, %v1532
    %v1534 = vpop.f32.mrb[0].mxu0
    %v1535 = vpop.f32.mrb[0].mxu0
    %v1536 = vpop.f32.mrb[0].mxu0
    %1537 = vdwg.mxu0
    %v1538 = vtanh.pop %v1533
    %v1539 = vpack.c.bf16 %v1538, %v1538
    %1540 = vst [vmem:[#allocation10] sm:$0xf] %v1539
    // Predicated region
    $region54: #{tpu_custom_call.1} parent=1 // pred_check
      _
    $region55: #{tpu_custom_call.1} parent=1 // pred_check_branch
      %1542 = sbr.rel (0) target = $region57
    $region56: #{tpu_custom_call.1} parent=1 // pred_region
      %s1544 = ssub.s32 64, 64
      %1545 = vsyncadd [#allocation4], %s1544
      %s1547 = sshll.u32 [#allocation10], 4
      %s1548 = int_to_ptr.vmem [resolvable:$true] %s1547
      %1550 = dma.vmem_to_hbm [thread:$0]  %s1548, 64, %s9, [#allocation4]
    $region57: #{tpu_custom_call.1} parent=1 // pred_fallthru
      _
    // Predicated region
    $region58: #{tpu_custom_call.1} parent=1 // pred_check
      _
    $region59: #{tpu_custom_call.1} parent=1 // pred_check_branch
      %1552 = sbr.rel (0) target = $region61
    $region60: #{tpu_custom_call.1} parent=1 // pred_region
      %1553 = dma.done [#allocation4], 64
    $region61: #{tpu_custom_call.1} parent=1 // pred_fallthru
      _
    %1554 = vsyncpa [#allocation3], 1
    %1555 = vsyncpa [#allocation6], 1
    %1556 = vsyncpa [#allocation9], 1
    %1557 = vsyncpa [#allocation4], 1

</llo_original>
